<compile_context>
chip_gen: v7x
topology: tpu7x:2x2x1
jax: 0.10.0
libtpu: 0.0.40
codegen_flags: <defaults>
</compile_context>

<pallas_src>
import functools

import jax
import jax.numpy as jnp
from jax.experimental import pallas as pl
from jax.experimental.pallas import tpu as pltpu

D_IN = 28 * 28        # 784
H1, H2 = 512, 128
D_OUT = 10
D_OUT_PAD = 128       # lane-dense logits (wrapper slices [:, :10])


def _round_up(n, m):
    return ((n + m - 1) // m) * m


def _mlp_kernel(x_ref, w1_ref, b1_ref, w2_ref, b2_ref, w3_ref, b3_ref, out_ref):
    # x arrives as f32 straight from HBM (single read); cast to bf16 in VMEM so
    # the wrapper never materializes a second copy of the activations.
    x = x_ref[...].astype(jnp.bfloat16)

    # Layer 1: Linear(784 -> 512) + ReLU  (bf16 MXU inputs, f32 accumulate;
    # bias-add / ReLU kept in f32 -- v5e VPU has no bf16 path).
    h1 = jnp.dot(x, w1_ref[...], preferred_element_type=jnp.float32)
    h1 = jnp.maximum(h1 + b1_ref[...], 0.0)
    # TODO(synk): training-mode Dropout(p=0.5) would need pltpu.prng_seed +
    # pltpu.stateful_bernoulli with 1/(1-p) scaling; eval-mode forward is identity.

    # Layer 2: Linear(512 -> 128) + ReLU
    h2 = jnp.dot(h1.astype(jnp.bfloat16), w2_ref[...],
                 preferred_element_type=jnp.float32)
    h2 = jnp.maximum(h2 + b2_ref[...], 0.0)

    # Layer 3: Linear(128 -> 128-padded); only the first 10 columns are real logits.
    out = jnp.dot(h2.astype(jnp.bfloat16), w3_ref[...],
                  preferred_element_type=jnp.float32)
    out_ref[...] = out + b3_ref[...]          # unmasked 128-lane store


def prepare_params(params):
    """One-time weight prep (pad / bf16 cast), hoisted out of the per-call forward."""
    w1, b1, w2, b2, w3, b3 = params
    w1p = w1.astype(jnp.bfloat16)                                           # [784, 512]
    w2p = w2.astype(jnp.bfloat16)                                           # [512, 128]
    w3p = jnp.pad(w3, ((0, 0), (0, D_OUT_PAD - D_OUT))).astype(jnp.bfloat16)  # [128, 128]
    b1p = b1.astype(jnp.float32)                                            # [1, 512]
    b2p = b2.astype(jnp.float32)                                            # [1, 128]
    b3p = jnp.pad(b3, ((0, 0), (0, D_OUT_PAD - D_OUT))).astype(jnp.float32)   # [1, 128]
    return (w1p, b1p, w2p, b2p, w3p, b3p)


@functools.partial(jax.jit, static_argnames=("tb",))
def mlp_classifier_e(x, prepared_params, *, tb=2048):
    """x: [B, 1, 28, 28] f32 (NCHW). prepared_params = prepare_params(params).
    Returns logits [B, 10] f32.

    tb: max batch-tile. 2048 (~28 MiB live incl. double-buffered x tiles) fits
    v7x's 64 MiB VMEM; on v5e/v6e (128 MiB) tb=4096 also works.
    """
    w1p, b1p, w2p, b2p, w3p, b3p = prepared_params
    B = x.shape[0]

    # Same flattening as x.view(x.size(0), -1); no pad / no dtype conversion --
    # the kernel reads the f32 activations directly and casts them in VMEM.
    x_flat = x.reshape(B, D_IN)

    # Batch tiling with minimal padding (Pallas masks the ragged last block):
    #  * multiple of 16: bf16 packs two rows per sublane
    #  * >=2 grid steps for real batches so ("parallel",) can use both v7x TCs
    desired_steps = max(pl.cdiv(B, tb), 2 if B >= 32 else 1)
    tb_eff = _round_up(pl.cdiv(B, desired_steps), 16)
    num_steps = pl.cdiv(B, tb_eff)

    flops = 2 * B * (D_IN * H1 + H1 * H2 + H2 * D_OUT_PAD)
    bytes_accessed = (x_flat.size * 4 +
                      (w1p.size + w2p.size + w3p.size) * 2 +
                      (b1p.size + b2p.size + b3p.size) * 4 +
                      B * D_OUT_PAD * 4)

    resident = dict(pipeline_mode=pl.Buffered(1))   # fetch once, single buffer

    out = pl.pallas_call(
        _mlp_kernel,
        out_shape=jax.ShapeDtypeStruct((B, D_OUT_PAD), jnp.float32),
        grid=(num_steps,),
        in_specs=[
            # x tile streams over the batch grid axis (double-buffered).
            pl.BlockSpec((tb_eff, D_IN), lambda i: (i, 0)),
            # Weights/biases: constant index_map + 1 buffer -> VMEM-resident.
            pl.BlockSpec((D_IN, H1), lambda i: (0, 0), **resident),
            pl.BlockSpec((1, H1), lambda i: (0, 0), **resident),
            pl.BlockSpec((H1, H2), lambda i: (0, 0), **resident),
            pl.BlockSpec((1, H2), lambda i: (0, 0), **resident),
            pl.BlockSpec((H2, D_OUT_PAD), lambda i: (0, 0), **resident),
            pl.BlockSpec((1, D_OUT_PAD), lambda i: (0, 0), **resident),
        ],
        out_specs=pl.BlockSpec((tb_eff, D_OUT_PAD), lambda i: (i, 0)),
        compiler_params=pltpu.CompilerParams(
            dimension_semantics=("parallel",),
            vmem_limit_bytes=48 * 1024 * 1024),
        cost_estimate=pl.CostEstimate(
            flops=flops, transcendentals=0, bytes_accessed=bytes_accessed),
    )(x_flat, w1p, b1p, w2p, b2p, w3p, b3p)

    return out[:, :D_OUT]


def init_params(key):
    """Deterministic init matching nn.Linear shapes: W stored as [in, out]."""
    k1, k2, k3, k4, k5, k6 = jax.random.split(key, 6)

    def linear_init(kw, kb, fan_in, fan_out):
        bound = 1.0 / jnp.sqrt(fan_in)
        w = jax.random.uniform(kw, (fan_in, fan_out), jnp.float32, -bound, bound)
        b = jax.random.uniform(kb, (1, fan_out), jnp.float32, -bound, bound)
        return w, b

    w1, b1 = linear_init(k1, k2, D_IN, H1)
    w2, b2 = linear_init(k3, k4, H1, H2)
    w3, b3 = linear_init(k5, k6, H2, D_OUT)
    return (w1, b1, w2, b2, w3, b3)


def reference_forward(x, params):
    """Pure-JAX reference mirroring the kernel's numerics: PyTorch eval-mode
    forward with bf16 matmul inputs and f32 accumulation / bias / ReLU."""
    w1, b1, w2, b2, w3, b3 = params
    bf = jnp.bfloat16
    h = x.reshape(x.shape[0], -1).astype(bf)
    h = jnp.maximum(jnp.dot(h, w1.astype(bf),
                            preferred_element_type=jnp.float32) + b1, 0.0)
    h = jnp.maximum(jnp.dot(h.astype(bf), w2.astype(bf),
                            preferred_element_type=jnp.float32) + b2, 0.0)
    return jnp.dot(h.astype(bf), w3.astype(bf),
                   preferred_element_type=jnp.float32) + b3


if __name__ == "__main__":
    key = jax.random.PRNGKey(0)
    k_x, k_p, k_x2 = jax.random.split(key, 3)
    params = init_params(k_p)
    prepped = prepare_params(params)        # one-time pad/cast, outside the forward

    # MNIST-like input, tiny batch -> single grid step (oversized/masked block).
    x = jax.random.normal(k_x, (2, 1, 28, 28), jnp.float32)
    out = jax.block_until_ready(mlp_classifier_e(x, prepped))
    ref = reference_forward(x, params)
    assert out.shape == (2, 10), out.shape
    assert jnp.allclose(out, ref, atol=5e-3, rtol=5e-3), "mismatch vs reference"

    # Multi-step pipelined grid with a ragged last block: 40 rows, 16-row tiles -> grid (3,).
    x2 = jax.random.normal(k_x2, (40, 1, 28, 28), jnp.float32)
    out2 = jax.block_until_ready(mlp_classifier_e(x2, prepped, tb=16))
    ref2 = reference_forward(x2, params)
    assert out2.shape == (40, 10), out2.shape
    assert jnp.allclose(out2, ref2, atol=5e-3, rtol=5e-3), "mismatch vs reference (tiled)"

    print("KERNEL_OK")
</pallas_src>

<mosaic_0001>
module attributes {stable_mosaic.version = 11 : i64} {
  func.func @_mlp_kernel(%arg0: i32, %arg1: memref<16x784xf32, #tpu.memory_space<vmem>>, %arg2: memref<784x512xbf16, #tpu.memory_space<vmem>>, %arg3: memref<1x512xf32, #tpu.memory_space<vmem>>, %arg4: memref<512x128xbf16, #tpu.memory_space<vmem>>, %arg5: memref<1x128xf32, #tpu.memory_space<vmem>>, %arg6: memref<128x128xbf16, #tpu.memory_space<vmem>>, %arg7: memref<1x128xf32, #tpu.memory_space<vmem>>, %arg8: memref<16x128xf32, #tpu.memory_space<vmem>>) attributes {dimension_semantics = [#tpu.dimension_semantics<parallel>], iteration_bounds = array<i64: 1>, scalar_prefetch = 0 : i64, scratch_operands = 0 : i64, tpu.core_type = #tpu.core_type<tc>, window_params = [{transform_indices = @transform_0, window_bounds = array<i64: 16, 784>}, {pipeline_mode = #tpu.pipeline_mode<synchronous>, transform_indices = @transform_1, window_bounds = array<i64: 784, 512>}, {pipeline_mode = #tpu.pipeline_mode<synchronous>, transform_indices = @transform_2, window_bounds = array<i64: 1, 512>}, {pipeline_mode = #tpu.pipeline_mode<synchronous>, transform_indices = @transform_3, window_bounds = array<i64: 512, 128>}, {pipeline_mode = #tpu.pipeline_mode<synchronous>, transform_indices = @transform_4, window_bounds = array<i64: 1, 128>}, {pipeline_mode = #tpu.pipeline_mode<synchronous>, transform_indices = @transform_5, window_bounds = array<i64: 128, 128>}, {pipeline_mode = #tpu.pipeline_mode<synchronous>, transform_indices = @transform_6, window_bounds = array<i64: 1, 128>}, {transform_indices = @transform_7, window_bounds = array<i64: 16, 128>}]} {
    %c0 = arith.constant 0 : index
    %c0_0 = arith.constant 0 : index
    %0 = vector.load %arg1[%c0, %c0_0] : memref<16x784xf32, #tpu.memory_space<vmem>>, vector<16x784xf32>
    %1 = arith.truncf %0 : vector<16x784xf32> to vector<16x784xbf16>
    %c0_1 = arith.constant 0 : index
    %c0_2 = arith.constant 0 : index
    %2 = vector.load %arg2[%c0_1, %c0_2] : memref<784x512xbf16, #tpu.memory_space<vmem>>, vector<784x512xbf16>
    %cst = arith.constant dense<0.000000e+00> : vector<16x512xf32>
    %3 = tpu.matmul %1, %2, %cst {dimension_numbers = #tpu.dot_dimension_numbers<[1], [0], [0], [1], [0, 0, 1, 1], [], []>} : vector<16x784xbf16>, vector<784x512xbf16>, vector<16x512xf32> -> vector<16x512xf32>
    %c0_3 = arith.constant 0 : index
    %c0_4 = arith.constant 0 : index
    %4 = vector.load %arg3[%c0_3, %c0_4] : memref<1x512xf32, #tpu.memory_space<vmem>>, vector<1x512xf32>
    %5 = vector.broadcast %4 : vector<1x512xf32> to vector<16x512xf32>
    %6 = arith.addf %3, %5 : vector<16x512xf32>
    %cst_5 = arith.constant 0.000000e+00 : f32
    %7 = vector.broadcast %cst_5 : f32 to vector<16x512xf32>
    %8 = arith.maximumf %6, %7 : vector<16x512xf32>
    %9 = arith.truncf %8 : vector<16x512xf32> to vector<16x512xbf16>
    %c0_6 = arith.constant 0 : index
    %c0_7 = arith.constant 0 : index
    %10 = vector.load %arg4[%c0_6, %c0_7] : memref<512x128xbf16, #tpu.memory_space<vmem>>, vector<512x128xbf16>
    %cst_8 = arith.constant dense<0.000000e+00> : vector<16x128xf32>
    %11 = tpu.matmul %9, %10, %cst_8 {dimension_numbers = #tpu.dot_dimension_numbers<[1], [0], [0], [1], [0, 0, 1, 1], [], []>} : vector<16x512xbf16>, vector<512x128xbf16>, vector<16x128xf32> -> vector<16x128xf32>
    %c0_9 = arith.constant 0 : index
    %c0_10 = arith.constant 0 : index
    %12 = vector.load %arg5[%c0_9, %c0_10] : memref<1x128xf32, #tpu.memory_space<vmem>>, vector<1x128xf32>
    %13 = vector.broadcast %12 : vector<1x128xf32> to vector<16x128xf32>
    %14 = arith.addf %11, %13 : vector<16x128xf32>
    %cst_11 = arith.constant 0.000000e+00 : f32
    %15 = vector.broadcast %cst_11 : f32 to vector<16x128xf32>
    %16 = arith.maximumf %14, %15 : vector<16x128xf32>
    %17 = arith.truncf %16 : vector<16x128xf32> to vector<16x128xbf16>
    %c0_12 = arith.constant 0 : index
    %c0_13 = arith.constant 0 : index
    %18 = vector.load %arg6[%c0_12, %c0_13] : memref<128x128xbf16, #tpu.memory_space<vmem>>, vector<128x128xbf16>
    %cst_14 = arith.constant dense<0.000000e+00> : vector<16x128xf32>
    %19 = tpu.matmul %17, %18, %cst_14 {dimension_numbers = #tpu.dot_dimension_numbers<[1], [0], [0], [1], [0, 0, 1, 1], [], []>} : vector<16x128xbf16>, vector<128x128xbf16>, vector<16x128xf32> -> vector<16x128xf32>
    %c0_15 = arith.constant 0 : index
    %c0_16 = arith.constant 0 : index
    %20 = vector.load %arg7[%c0_15, %c0_16] : memref<1x128xf32, #tpu.memory_space<vmem>>, vector<1x128xf32>
    %21 = vector.broadcast %20 : vector<1x128xf32> to vector<16x128xf32>
    %22 = arith.addf %19, %21 : vector<16x128xf32>
    %c0_17 = arith.constant 0 : index
    %c0_18 = arith.constant 0 : index
    %23 = vector.load %arg8[%c0_17, %c0_18] : memref<16x128xf32, #tpu.memory_space<vmem>>, vector<16x128xf32>
    tpu.vector_store %arg8[%c0_17, %c0_18], %22 {strides = array<i32>} : memref<16x128xf32, #tpu.memory_space<vmem>>, vector<16x128xf32>,
    return
  }
  func.func @transform_0(%arg0: i32) -> (i32, i32) {
    %c0_i32 = arith.constant 0 : i32
    %c0_i32_0 = arith.constant 0 : i32
    return %arg0, %c0_i32 : i32, i32
  }
  func.func @transform_1(%arg0: i32) -> (i32, i32) {
    %c0_i32 = arith.constant 0 : i32
    %c0_i32_0 = arith.constant 0 : i32
    %c0_i32_1 = arith.constant 0 : i32
    return %c0_i32, %c0_i32_0 : i32, i32
  }
  func.func @transform_2(%arg0: i32) -> (i32, i32) {
    %c0_i32 = arith.constant 0 : i32
    %c0_i32_0 = arith.constant 0 : i32
    %c0_i32_1 = arith.constant 0 : i32
    return %c0_i32, %c0_i32_0 : i32, i32
  }
  func.func @transform_3(%arg0: i32) -> (i32, i32) {
    %c0_i32 = arith.constant 0 : i32
    %c0_i32_0 = arith.constant 0 : i32
    %c0_i32_1 = arith.constant 0 : i32
    return %c0_i32, %c0_i32_0 : i32, i32
  }
  func.func @transform_4(%arg0: i32) -> (i32, i32) {
    %c0_i32 = arith.constant 0 : i32
    %c0_i32_0 = arith.constant 0 : i32
    %c0_i32_1 = arith.constant 0 : i32
    return %c0_i32, %c0_i32_0 : i32, i32
  }
  func.func @transform_5(%arg0: i32) -> (i32, i32) {
    %c0_i32 = arith.constant 0 : i32
    %c0_i32_0 = arith.constant 0 : i32
    %c0_i32_1 = arith.constant 0 : i32
    return %c0_i32, %c0_i32_0 : i32, i32
  }
  func.func @transform_6(%arg0: i32) -> (i32, i32) {
    %c0_i32 = arith.constant 0 : i32
    %c0_i32_0 = arith.constant 0 : i32
    %c0_i32_1 = arith.constant 0 : i32
    return %c0_i32, %c0_i32_0 : i32, i32
  }
  func.func @transform_7(%arg0: i32) -> (i32, i32) {
    %c0_i32 = arith.constant 0 : i32
    %c0_i32_0 = arith.constant 0 : i32
    return %arg0, %c0_i32 : i32, i32
  }
}

</mosaic_0001>

<llo_original>
// kernel: mlp_classifier_e.1
$region0: #{mlp_classifier_e.1}
  #allocation0 [shape = 'u32[]', space=smem, size = 0x4, offset = 0x4, fixed_abs, tag = 'smem constant byte address 0x4 - core index']
  #allocation1 [shape = 'u32[144,128]{1,0:T(1,128)}', space=vmem, size = 0x12000, scoped, tag = 'internal scratch']
  %s0 = inlined_call_operand.vmem [shape: f32[2,784], index: 0, kind: input, shape index: {}]
  %s1 = inlined_call_operand.hbm [shape: bf16[784,512], index: 1, kind: input, shape index: {}]
  %s2 = inlined_call_operand.vmem [shape: f32[1,512], index: 2, kind: input, shape index: {}]
  %s3 = inlined_call_operand.hbm [shape: bf16[512,128], index: 3, kind: input, shape index: {}]
  %s4 = inlined_call_operand.vmem [shape: f32[1,128], index: 4, kind: input, shape index: {}]
  %s5 = inlined_call_operand.vmem [shape: bf16[128,128], index: 5, kind: input, shape index: {}]
  %s6 = inlined_call_operand.vmem [shape: f32[1,128], index: 6, kind: input, shape index: {}]
  %s7 = inlined_call_operand.hbm [shape: f32[2,128], index: 7, kind: output, shape index: {}]
  %s8 = sld [smem:[#allocation0]]
  $region46: #{mlp_classifier_e.1} parent=0
    _
  %s10 = ssub.s32 1, %s8
  %s11 = scalar_select 0, %s10, %s8
  $region1: #{mlp_classifier_e.1} parent=0
    #allocation2 [shape = 'u8[802816]{0}', space=vmem, size = 0xc4000, scoped, tag = 'input window, operand 1, single buffered']
    #allocation3 [shape = 's32[1]{0}', space=sflag, size = 0x4, scoped, tag = 'scoped memory for mlp_classifier_e.1']
    #allocation4 [shape = 's32[1]{0}', space=sflag, size = 0x4, scoped, tag = 'scoped memory for mlp_classifier_e.1']
    #allocation5 [shape = 'u8[131072]{0}', space=vmem, size = 0x20000, scoped, tag = 'input window, operand 3, single buffered']
    #allocation6 [shape = 's32[1]{0}', space=sflag, size = 0x4, scoped, tag = 'scoped memory for mlp_classifier_e.1']
    #allocation7 [shape = 'u8[8192]{0}', space=vmem, size = 0x2000, scoped, tag = 'output window, operand 0, single buffered']
    %12 = vsyncpa [#allocation3], 0
    %13 = vsyncpa [#allocation6], 0
    %14 = vsyncpa [#allocation4], 0
    // Predicated region
    $region2: #{mlp_classifier_e.1} parent=1 // pred_check
      _
    $region3: #{mlp_classifier_e.1} parent=1 // pred_check_branch
      %16 = sbr.rel (0) target = $region5
    $region4: #{mlp_classifier_e.1} parent=1 // pred_region
      _
    $region5: #{mlp_classifier_e.1} parent=1 // pred_fallthru
      _
    // Predicated region
    $region6: #{mlp_classifier_e.1} parent=1 // pred_check
      _
    $region7: #{mlp_classifier_e.1} parent=1 // pred_check_branch
      %18 = sbr.rel (0) target = $region9
    $region8: #{mlp_classifier_e.1} parent=1 // pred_region
      %s20 = ssub.s32 25088, 25088
      %21 = vsyncadd [#allocation3], %s20
      %s22 = sshll.u32 [#allocation2], 4
      %s23 = int_to_ptr.vmem [resolvable:$true] %s22
      %28 = dma.hbm_to_vmem [thread:$0]  %s1, 25088, %s23, [#allocation3], 256, 256, 16
    $region9: #{mlp_classifier_e.1} parent=1 // pred_fallthru
      _
    // Predicated region
    $region10: #{mlp_classifier_e.1} parent=1 // pred_check
      _
    $region11: #{mlp_classifier_e.1} parent=1 // pred_check_branch
      %30 = sbr.rel (0) target = $region13
    $region12: #{mlp_classifier_e.1} parent=1 // pred_region
      _
    $region13: #{mlp_classifier_e.1} parent=1 // pred_fallthru
      _
    // Predicated region
    $region14: #{mlp_classifier_e.1} parent=1 // pred_check
      _
    $region15: #{mlp_classifier_e.1} parent=1 // pred_check_branch
      %32 = sbr.rel (0) target = $region17
    $region16: #{mlp_classifier_e.1} parent=1 // pred_region
      %s34 = ssub.s32 4096, 4096
      %35 = vsyncadd [#allocation6], %s34
      %s36 = sshll.u32 [#allocation5], 4
      %s37 = int_to_ptr.vmem [resolvable:$true] %s36
      %42 = dma.hbm_to_vmem [thread:$0]  %s3, 4096, %s37, [#allocation6], 64, 64, 4
    $region17: #{mlp_classifier_e.1} parent=1 // pred_fallthru
      _
    // Predicated region
    $region18: #{mlp_classifier_e.1} parent=1 // pred_check
      _
    $region19: #{mlp_classifier_e.1} parent=1 // pred_check_branch
      %44 = sbr.rel (0) target = $region21
    $region20: #{mlp_classifier_e.1} parent=1 // pred_region
      _
    $region21: #{mlp_classifier_e.1} parent=1 // pred_fallthru
      _
    // Predicated region
    $region22: #{mlp_classifier_e.1} parent=1 // pred_check
      _
    $region23: #{mlp_classifier_e.1} parent=1 // pred_check_branch
      %46 = sbr.rel (0) target = $region25
    $region24: #{mlp_classifier_e.1} parent=1 // pred_region
      _
    $region25: #{mlp_classifier_e.1} parent=1 // pred_fallthru
      _
    // Predicated region
    $region26: #{mlp_classifier_e.1} parent=1 // pred_check
      _
    $region27: #{mlp_classifier_e.1} parent=1 // pred_check_branch
      %48 = sbr.rel (0) target = $region29
    $region28: #{mlp_classifier_e.1} parent=1 // pred_region
      _
    $region29: #{mlp_classifier_e.1} parent=1 // pred_fallthru
      _
    // Predicated region
    $region30: #{mlp_classifier_e.1} parent=1 // pred_check
      _
    $region31: #{mlp_classifier_e.1} parent=1 // pred_check_branch
      %50 = sbr.rel (0) target = $region33
    $region32: #{mlp_classifier_e.1} parent=1 // pred_region
      %51 = dma.done [#allocation3], 25088
    $region33: #{mlp_classifier_e.1} parent=1 // pred_fallthru
      _
    // Predicated region
    $region34: #{mlp_classifier_e.1} parent=1 // pred_check
      _
    $region35: #{mlp_classifier_e.1} parent=1 // pred_check_branch
      %53 = sbr.rel (0) target = $region37
    $region36: #{mlp_classifier_e.1} parent=1 // pred_region
      %54 = dma.done [#allocation6], 4096
    $region37: #{mlp_classifier_e.1} parent=1 // pred_fallthru
      _
    %v56 = vld [vmem:[%s0] sm:$0xff]
    %v57 = vld [vmem:[%s0 + $0x8] sm:$0x3f]
    %v58 = vld [vmem:[%s0 + $0xe] sm:$0xff]
    %v59 = vld [vmem:[%s0 + $0x16] sm:$0x3f]
    %v60 = vld [vmem:[%s0 + $0x1c] sm:$0xff]
    %v61 = vld [vmem:[%s0 + $0x24] sm:$0x3f]
    %v62 = vld [vmem:[%s0 + $0x2a] sm:$0xff]
    %v63 = vld [vmem:[%s0 + $0x32] sm:$0x3f]
    %v64 = vld [vmem:[%s0 + $0x38] sm:$0xff]
    %v65 = vld [vmem:[%s0 + $0x40] sm:$0x3f]
    %v66 = vld [vmem:[%s0 + $0x46] sm:$0xff]
    %v67 = vld [vmem:[%s0 + $0x4e] sm:$0x3f]
    %v68 = vld [vmem:[%s0 + $0x54] sm:$0xff]
    %v69 = vld [vmem:[%s0 + $0x5c] sm:$0x3f]
    %v70 = vld [vmem:[%s0 + $0x62] sm:$0xff]
    %v71 = vld [vmem:[%s0 + $0x6a] sm:$0x3f]
    %v88 = vcombine.low %v56, %v58
    %v89 = vcombine.high %v56, %v58
    %v90 = vcombine.low %v60, %v62
    %v91 = vcombine.high %v60, %v62
    %v93 = vunpack.c.l.s4 1983009808
    %v94 = vunpack.c.0.s8 %v93
    %v95 = vlaneseq
    %v96 = vshrl.u32 %v95, 7
    %v97 = vsub.s32 %v94, %v96
    %v98 = vrot.slane %v88, %v97
    %v100 = vunpack.c.l.s4 1983009808
    %v101 = vunpack.c.0.s8 %v100
    %v102 = vlaneseq
    %v103 = vshrl.u32 %v102, 7
    %v104 = vsub.s32 %v101, %v103
    %v105 = vrot.slane %v89, %v104
    %v107 = vunpack.c.l.s4 1983009808
    %v108 = vunpack.c.0.s8 %v107
    %v109 = vlaneseq
    %v110 = vshrl.u32 %v109, 7
    %v111 = vsub.s32 %v108, %v110
    %v112 = vrot.slane %v90, %v111
    %v114 = vunpack.c.l.s4 1983009808
    %v115 = vunpack.c.0.s8 %v114
    %v116 = vlaneseq
    %v117 = vshrl.u32 %v116, 7
    %v118 = vsub.s32 %v115, %v117
    %v119 = vrot.slane %v91, %v118
    %v120 = vcombine.low %v98, %v112
    %v121 = vcombine.high %v98, %v112
    %v122 = vcombine.low %v105, %v119
    %v123 = vcombine.high %v105, %v119
    %v124 = vcombine.low %v57, %v59
    %v125 = vcombine.high %v57, %v59
    %v126 = vcombine.low %v61, %v63
    %v127 = vcombine.high %v61, %v63
    %v129 = vunpack.c.l.s4 1983009808
    %v130 = vunpack.c.0.s8 %v129
    %v131 = vlaneseq
    %v132 = vshrl.u32 %v131, 7
    %v133 = vsub.s32 %v130, %v132
    %v134 = vrot.slane %v124, %v133
    %v136 = vunpack.c.l.s4 1983009808
    %v137 = vunpack.c.0.s8 %v136
    %v138 = vlaneseq
    %v139 = vshrl.u32 %v138, 7
    %v140 = vsub.s32 %v137, %v139
    %v141 = vrot.slane %v125, %v140
    %v143 = vunpack.c.l.s4 1983009808
    %v144 = vunpack.c.0.s8 %v143
    %v145 = vlaneseq
    %v146 = vshrl.u32 %v145, 7
    %v147 = vsub.s32 %v144, %v146
    %v148 = vrot.slane %v126, %v147
    %v150 = vunpack.c.l.s4 1983009808
    %v151 = vunpack.c.0.s8 %v150
    %v152 = vlaneseq
    %v153 = vshrl.u32 %v152, 7
    %v154 = vsub.s32 %v151, %v153
    %v155 = vrot.slane %v127, %v154
    %v156 = vcombine.low %v134, %v148
    %v157 = vcombine.high %v134, %v148
    %v158 = vcombine.low %v141, %v155
    %v159 = vcombine.low %v64, %v66
    %v160 = vcombine.high %v64, %v66
    %v161 = vcombine.low %v68, %v70
    %v162 = vcombine.high %v68, %v70
    %v164 = vunpack.c.l.s4 1983009808
    %v165 = vunpack.c.0.s8 %v164
    %v166 = vlaneseq
    %v167 = vshrl.u32 %v166, 7
    %v168 = vsub.s32 %v165, %v167
    %v169 = vrot.slane %v159, %v168
    %v171 = vunpack.c.l.s4 1983009808
    %v172 = vunpack.c.0.s8 %v171
    %v173 = vlaneseq
    %v174 = vshrl.u32 %v173, 7
    %v175 = vsub.s32 %v172, %v174
    %v176 = vrot.slane %v160, %v175
    %v178 = vunpack.c.l.s4 1983009808
    %v179 = vunpack.c.0.s8 %v178
    %v180 = vlaneseq
    %v181 = vshrl.u32 %v180, 7
    %v182 = vsub.s32 %v179, %v181
    %v183 = vrot.slane %v161, %v182
    %v185 = vunpack.c.l.s4 1983009808
    %v186 = vunpack.c.0.s8 %v185
    %v187 = vlaneseq
    %v188 = vshrl.u32 %v187, 7
    %v189 = vsub.s32 %v186, %v188
    %v190 = vrot.slane %v162, %v189
    %v191 = vcombine.low %v169, %v183
    %v192 = vcombine.high %v169, %v183
    %v193 = vcombine.low %v176, %v190
    %v194 = vcombine.high %v176, %v190
    %v195 = vcombine.low %v65, %v67
    %v196 = vcombine.high %v65, %v67
    %v197 = vcombine.low %v69, %v71
    %v198 = vcombine.high %v69, %v71
    %v200 = vunpack.c.l.s4 1983009808
    %v201 = vunpack.c.0.s8 %v200
    %v202 = vlaneseq
    %v203 = vshrl.u32 %v202, 7
    %v204 = vsub.s32 %v201, %v203
    %v205 = vrot.slane %v195, %v204
    %v207 = vunpack.c.l.s4 1983009808
    %v208 = vunpack.c.0.s8 %v207
    %v209 = vlaneseq
    %v210 = vshrl.u32 %v209, 7
    %v211 = vsub.s32 %v208, %v210
    %v212 = vrot.slane %v196, %v211
    %v214 = vunpack.c.l.s4 1983009808
    %v215 = vunpack.c.0.s8 %v214
    %v216 = vlaneseq
    %v217 = vshrl.u32 %v216, 7
    %v218 = vsub.s32 %v215, %v217
    %v219 = vrot.slane %v197, %v218
    %v221 = vunpack.c.l.s4 1983009808
    %v222 = vunpack.c.0.s8 %v221
    %v223 = vlaneseq
    %v224 = vshrl.u32 %v223, 7
    %v225 = vsub.s32 %v222, %v224
    %v226 = vrot.slane %v198, %v225
    %v227 = vcombine.low %v205, %v219
    %v228 = vcombine.high %v205, %v219
    %v229 = vcombine.low %v212, %v226
    %v244 = vpack.c.bf16 %v191, %v120
    %v245 = vpack.c.bf16 %v192, %v121
    %v246 = vpack.c.bf16 %v193, %v122
    %v247 = vpack.c.bf16 %v194, %v123
    %v248 = vpack.c.bf16 %v227, %v156
    %v249 = vpack.c.bf16 %v228, %v157
    %v250 = vpack.c.bf16 %v229, %v158
    %v251 = vld [vmem:[#allocation2] sm:$0xff]
    %v252 = vld [vmem:[#allocation2 + $0x8] sm:$0xff]
    %v253 = vld [vmem:[#allocation2 + $0x10] sm:$0xff]
    %v254 = vld [vmem:[#allocation2 + $0x18] sm:$0xff]
    %v255 = vld [vmem:[#allocation2 + $0x20] sm:$0xff]
    %v256 = vld [vmem:[#allocation2 + $0x28] sm:$0xff]
    %v257 = vld [vmem:[#allocation2 + $0x30] sm:$0xff]
    %v258 = vld [vmem:[#allocation2 + $0x38] sm:$0xff]
    %v259 = vld [vmem:[#allocation2 + $0x40] sm:$0xff]
    %v260 = vld [vmem:[#allocation2 + $0x48] sm:$0xff]
    %v261 = vld [vmem:[#allocation2 + $0x50] sm:$0xff]
    %v262 = vld [vmem:[#allocation2 + $0x58] sm:$0xff]
    %v263 = vld [vmem:[#allocation2 + $0x60] sm:$0xff]
    %v264 = vld [vmem:[#allocation2 + $0x68] sm:$0xff]
    %v265 = vld [vmem:[#allocation2 + $0x70] sm:$0xff]
    %v266 = vld [vmem:[#allocation2 + $0x78] sm:$0xff]
    %v267 = vld [vmem:[#allocation2 + $0x80] sm:$0xff]
    %v268 = vld [vmem:[#allocation2 + $0x88] sm:$0xff]
    %v269 = vld [vmem:[#allocation2 + $0x90] sm:$0xff]
    %v270 = vld [vmem:[#allocation2 + $0x98] sm:$0xff]
    %v271 = vld [vmem:[#allocation2 + $0xa0] sm:$0xff]
    %v272 = vld [vmem:[#allocation2 + $0xa8] sm:$0xff]
    %v273 = vld [vmem:[#allocation2 + $0xb0] sm:$0xff]
    %v274 = vld [vmem:[#allocation2 + $0xb8] sm:$0xff]
    %v275 = vld [vmem:[#allocation2 + $0xc0] sm:$0xff]
    %v276 = vld [vmem:[#allocation2 + $0xc8] sm:$0xff]
    %v277 = vld [vmem:[#allocation2 + $0xd0] sm:$0xff]
    %v278 = vld [vmem:[#allocation2 + $0xd8] sm:$0xff]
    %v279 = vld [vmem:[#allocation2 + $0xe0] sm:$0xff]
    %v280 = vld [vmem:[#allocation2 + $0xe8] sm:$0xff]
    %v281 = vld [vmem:[#allocation2 + $0xf0] sm:$0xff]
    %v282 = vld [vmem:[#allocation2 + $0xf8] sm:$0xff]
    %v283 = vld [vmem:[#allocation2 + $0x100] sm:$0xff]
    %v284 = vld [vmem:[#allocation2 + $0x108] sm:$0xff]
    %v285 = vld [vmem:[#allocation2 + $0x110] sm:$0xff]
    %v286 = vld [vmem:[#allocation2 + $0x118] sm:$0xff]
    %v287 = vld [vmem:[#allocation2 + $0x120] sm:$0xff]
    %v288 = vld [vmem:[#allocation2 + $0x128] sm:$0xff]
    %v289 = vld [vmem:[#allocation2 + $0x130] sm:$0xff]
    %v290 = vld [vmem:[#allocation2 + $0x138] sm:$0xff]
    %v291 = vld [vmem:[#allocation2 + $0x140] sm:$0xff]
    %v292 = vld [vmem:[#allocation2 + $0x148] sm:$0xff]
    %v293 = vld [vmem:[#allocation2 + $0x150] sm:$0xff]
    %v294 = vld [vmem:[#allocation2 + $0x158] sm:$0xff]
    %v295 = vld [vmem:[#allocation2 + $0x160] sm:$0xff]
    %v296 = vld [vmem:[#allocation2 + $0x168] sm:$0xff]
    %v297 = vld [vmem:[#allocation2 + $0x170] sm:$0xff]
    %v298 = vld [vmem:[#allocation2 + $0x178] sm:$0xff]
    %v299 = vld [vmem:[#allocation2 + $0x180] sm:$0xff]
    %v300 = vld [vmem:[#allocation2 + $0x188] sm:$0xff]
    %v301 = vld [vmem:[#allocation2 + $0x190] sm:$0xff]
    %v302 = vld [vmem:[#allocation2 + $0x198] sm:$0xff]
    %v303 = vld [vmem:[#allocation2 + $0x1a0] sm:$0xff]
    %v304 = vld [vmem:[#allocation2 + $0x1a8] sm:$0xff]
    %v305 = vld [vmem:[#allocation2 + $0x1b0] sm:$0xff]
    %v306 = vld [vmem:[#allocation2 + $0x1b8] sm:$0xff]
    %v307 = vld [vmem:[#allocation2 + $0x1c0] sm:$0xff]
    %v308 = vld [vmem:[#allocation2 + $0x1c8] sm:$0xff]
    %v309 = vld [vmem:[#allocation2 + $0x1d0] sm:$0xff]
    %v310 = vld [vmem:[#allocation2 + $0x1d8] sm:$0xff]
    %v311 = vld [vmem:[#allocation2 + $0x1e0] sm:$0xff]
    %v312 = vld [vmem:[#allocation2 + $0x1e8] sm:$0xff]
    %v313 = vld [vmem:[#allocation2 + $0x1f0] sm:$0xff]
    %v314 = vld [vmem:[#allocation2 + $0x1f8] sm:$0xff]
    %v315 = vld [vmem:[#allocation2 + $0x200] sm:$0xff]
    %v316 = vld [vmem:[#allocation2 + $0x208] sm:$0xff]
    %v317 = vld [vmem:[#allocation2 + $0x210] sm:$0xff]
    %v318 = vld [vmem:[#allocation2 + $0x218] sm:$0xff]
    %v319 = vld [vmem:[#allocation2 + $0x220] sm:$0xff]
    %v320 = vld [vmem:[#allocation2 + $0x228] sm:$0xff]
    %v321 = vld [vmem:[#allocation2 + $0x230] sm:$0xff]
    %v322 = vld [vmem:[#allocation2 + $0x238] sm:$0xff]
    %v323 = vld [vmem:[#allocation2 + $0x240] sm:$0xff]
    %v324 = vld [vmem:[#allocation2 + $0x248] sm:$0xff]
    %v325 = vld [vmem:[#allocation2 + $0x250] sm:$0xff]
    %v326 = vld [vmem:[#allocation2 + $0x258] sm:$0xff]
    %v327 = vld [vmem:[#allocation2 + $0x260] sm:$0xff]
    %v328 = vld [vmem:[#allocation2 + $0x268] sm:$0xff]
    %v329 = vld [vmem:[#allocation2 + $0x270] sm:$0xff]
    %v330 = vld [vmem:[#allocation2 + $0x278] sm:$0xff]
    %v331 = vld [vmem:[#allocation2 + $0x280] sm:$0xff]
    %v332 = vld [vmem:[#allocation2 + $0x288] sm:$0xff]
    %v333 = vld [vmem:[#allocation2 + $0x290] sm:$0xff]
    %v334 = vld [vmem:[#allocation2 + $0x298] sm:$0xff]
    %v335 = vld [vmem:[#allocation2 + $0x2a0] sm:$0xff]
    %v336 = vld [vmem:[#allocation2 + $0x2a8] sm:$0xff]
    %v337 = vld [vmem:[#allocation2 + $0x2b0] sm:$0xff]
    %v338 = vld [vmem:[#allocation2 + $0x2b8] sm:$0xff]
    %v339 = vld [vmem:[#allocation2 + $0x2c0] sm:$0xff]
    %v340 = vld [vmem:[#allocation2 + $0x2c8] sm:$0xff]
    %v341 = vld [vmem:[#allocation2 + $0x2d0] sm:$0xff]
    %v342 = vld [vmem:[#allocation2 + $0x2d8] sm:$0xff]
    %v343 = vld [vmem:[#allocation2 + $0x2e0] sm:$0xff]
    %v344 = vld [vmem:[#allocation2 + $0x2e8] sm:$0xff]
    %v345 = vld [vmem:[#allocation2 + $0x2f0] sm:$0xff]
    %v346 = vld [vmem:[#allocation2 + $0x2f8] sm:$0xff]
    %v347 = vld [vmem:[#allocation2 + $0x300] sm:$0xff]
    %v348 = vld [vmem:[#allocation2 + $0x308] sm:$0xff]
    %v349 = vld [vmem:[#allocation2 + $0x310] sm:$0xff]
    %v350 = vld [vmem:[#allocation2 + $0x318] sm:$0xff]
    %v351 = vld [vmem:[#allocation2 + $0x320] sm:$0xff]
    %v352 = vld [vmem:[#allocation2 + $0x328] sm:$0xff]
    %v353 = vld [vmem:[#allocation2 + $0x330] sm:$0xff]
    %v354 = vld [vmem:[#allocation2 + $0x338] sm:$0xff]
    %v355 = vld [vmem:[#allocation2 + $0x340] sm:$0xff]
    %v356 = vld [vmem:[#allocation2 + $0x348] sm:$0xff]
    %v357 = vld [vmem:[#allocation2 + $0x350] sm:$0xff]
    %v358 = vld [vmem:[#allocation2 + $0x358] sm:$0xff]
    %v359 = vld [vmem:[#allocation2 + $0x360] sm:$0xff]
    %v360 = vld [vmem:[#allocation2 + $0x368] sm:$0xff]
    %v361 = vld [vmem:[#allocation2 + $0x370] sm:$0xff]
    %v362 = vld [vmem:[#allocation2 + $0x378] sm:$0xff]
    %v363 = vld [vmem:[#allocation2 + $0x380] sm:$0xff]
    %v364 = vld [vmem:[#allocation2 + $0x388] sm:$0xff]
    %v365 = vld [vmem:[#allocation2 + $0x390] sm:$0xff]
    %v366 = vld [vmem:[#allocation2 + $0x398] sm:$0xff]
    %v367 = vld [vmem:[#allocation2 + $0x3a0] sm:$0xff]
    %v368 = vld [vmem:[#allocation2 + $0x3a8] sm:$0xff]
    %v369 = vld [vmem:[#allocation2 + $0x3b0] sm:$0xff]
    %v370 = vld [vmem:[#allocation2 + $0x3b8] sm:$0xff]
    %v371 = vld [vmem:[#allocation2 + $0x3c0] sm:$0xff]
    %v372 = vld [vmem:[#allocation2 + $0x3c8] sm:$0xff]
    %v373 = vld [vmem:[#allocation2 + $0x3d0] sm:$0xff]
    %v374 = vld [vmem:[#allocation2 + $0x3d8] sm:$0xff]
    %v375 = vld [vmem:[#allocation2 + $0x3e0] sm:$0xff]
    %v376 = vld [vmem:[#allocation2 + $0x3e8] sm:$0xff]
    %v377 = vld [vmem:[#allocation2 + $0x3f0] sm:$0xff]
    %v378 = vld [vmem:[#allocation2 + $0x3f8] sm:$0xff]
    %v379 = vld [vmem:[#allocation2 + $0x400] sm:$0xff]
    %v380 = vld [vmem:[#allocation2 + $0x408] sm:$0xff]
    %v381 = vld [vmem:[#allocation2 + $0x410] sm:$0xff]
    %v382 = vld [vmem:[#allocation2 + $0x418] sm:$0xff]
    %v383 = vld [vmem:[#allocation2 + $0x420] sm:$0xff]
    %v384 = vld [vmem:[#allocation2 + $0x428] sm:$0xff]
    %v385 = vld [vmem:[#allocation2 + $0x430] sm:$0xff]
    %v386 = vld [vmem:[#allocation2 + $0x438] sm:$0xff]
    %v387 = vld [vmem:[#allocation2 + $0x440] sm:$0xff]
    %v388 = vld [vmem:[#allocation2 + $0x448] sm:$0xff]
    %v389 = vld [vmem:[#allocation2 + $0x450] sm:$0xff]
    %v390 = vld [vmem:[#allocation2 + $0x458] sm:$0xff]
    %v391 = vld [vmem:[#allocation2 + $0x460] sm:$0xff]
    %v392 = vld [vmem:[#allocation2 + $0x468] sm:$0xff]
    %v393 = vld [vmem:[#allocation2 + $0x470] sm:$0xff]
    %v394 = vld [vmem:[#allocation2 + $0x478] sm:$0xff]
    %v395 = vld [vmem:[#allocation2 + $0x480] sm:$0xff]
    %v396 = vld [vmem:[#allocation2 + $0x488] sm:$0xff]
    %v397 = vld [vmem:[#allocation2 + $0x490] sm:$0xff]
    %v398 = vld [vmem:[#allocation2 + $0x498] sm:$0xff]
    %v399 = vld [vmem:[#allocation2 + $0x4a0] sm:$0xff]
    %v400 = vld [vmem:[#allocation2 + $0x4a8] sm:$0xff]
    %v401 = vld [vmem:[#allocation2 + $0x4b0] sm:$0xff]
    %v402 = vld [vmem:[#allocation2 + $0x4b8] sm:$0xff]
    %v403 = vld [vmem:[#allocation2 + $0x4c0] sm:$0xff]
    %v404 = vld [vmem:[#allocation2 + $0x4c8] sm:$0xff]
    %v405 = vld [vmem:[#allocation2 + $0x4d0] sm:$0xff]
    %v406 = vld [vmem:[#allocation2 + $0x4d8] sm:$0xff]
    %v407 = vld [vmem:[#allocation2 + $0x4e0] sm:$0xff]
    %v408 = vld [vmem:[#allocation2 + $0x4e8] sm:$0xff]
    %v409 = vld [vmem:[#allocation2 + $0x4f0] sm:$0xff]
    %v410 = vld [vmem:[#allocation2 + $0x4f8] sm:$0xff]
    %v411 = vld [vmem:[#allocation2 + $0x500] sm:$0xff]
    %v412 = vld [vmem:[#allocation2 + $0x508] sm:$0xff]
    %v413 = vld [vmem:[#allocation2 + $0x510] sm:$0xff]
    %v414 = vld [vmem:[#allocation2 + $0x518] sm:$0xff]
    %v415 = vld [vmem:[#allocation2 + $0x520] sm:$0xff]
    %v416 = vld [vmem:[#allocation2 + $0x528] sm:$0xff]
    %v417 = vld [vmem:[#allocation2 + $0x530] sm:$0xff]
    %v418 = vld [vmem:[#allocation2 + $0x538] sm:$0xff]
    %v419 = vld [vmem:[#allocation2 + $0x540] sm:$0xff]
    %v420 = vld [vmem:[#allocation2 + $0x548] sm:$0xff]
    %v421 = vld [vmem:[#allocation2 + $0x550] sm:$0xff]
    %v422 = vld [vmem:[#allocation2 + $0x558] sm:$0xff]
    %v423 = vld [vmem:[#allocation2 + $0x560] sm:$0xff]
    %v424 = vld [vmem:[#allocation2 + $0x568] sm:$0xff]
    %v425 = vld [vmem:[#allocation2 + $0x570] sm:$0xff]
    %v426 = vld [vmem:[#allocation2 + $0x578] sm:$0xff]
    %v427 = vld [vmem:[#allocation2 + $0x580] sm:$0xff]
    %v428 = vld [vmem:[#allocation2 + $0x588] sm:$0xff]
    %v429 = vld [vmem:[#allocation2 + $0x590] sm:$0xff]
    %v430 = vld [vmem:[#allocation2 + $0x598] sm:$0xff]
    %v431 = vld [vmem:[#allocation2 + $0x5a0] sm:$0xff]
    %v432 = vld [vmem:[#allocation2 + $0x5a8] sm:$0xff]
    %v433 = vld [vmem:[#allocation2 + $0x5b0] sm:$0xff]
    %v434 = vld [vmem:[#allocation2 + $0x5b8] sm:$0xff]
    %v435 = vld [vmem:[#allocation2 + $0x5c0] sm:$0xff]
    %v436 = vld [vmem:[#allocation2 + $0x5c8] sm:$0xff]
    %v437 = vld [vmem:[#allocation2 + $0x5d0] sm:$0xff]
    %v438 = vld [vmem:[#allocation2 + $0x5d8] sm:$0xff]
    %v439 = vld [vmem:[#allocation2 + $0x5e0] sm:$0xff]
    %v440 = vld [vmem:[#allocation2 + $0x5e8] sm:$0xff]
    %v441 = vld [vmem:[#allocation2 + $0x5f0] sm:$0xff]
    %v442 = vld [vmem:[#allocation2 + $0x5f8] sm:$0xff]
    %v443 = vld [vmem:[#allocation2 + $0x600] sm:$0xff]
    %v444 = vld [vmem:[#allocation2 + $0x608] sm:$0xff]
    %v445 = vld [vmem:[#allocation2 + $0x610] sm:$0xff]
    %v446 = vld [vmem:[#allocation2 + $0x618] sm:$0xff]
    %v447 = vld [vmem:[%s2] sm:$0xf]
    %v449 = vlaneseq
    %v450 = vshrl.u32 %v449, 7
    %v451 = vsub.s32 0, %v450
    %v452 = vrot.slane %v447, %v451
    %v453 = vlaneseq
    %v454 = vshrl.u32 %v453, 7
    %v455 = vsub.s32 1, %v454
    %v456 = vrot.slane %v447, %v455
    %v457 = vlaneseq
    %v458 = vshrl.u32 %v457, 7
    %v459 = vsub.s32 2, %v458
    %v460 = vrot.slane %v447, %v459
    %v461 = vlaneseq
    %v462 = vshrl.u32 %v461, 7
    %v463 = vsub.s32 3, %v462
    %v464 = vrot.slane %v447, %v463
    %v665 = vunpack.c.l.b16 %v251
    %v666 = vunpack.c.h.b16 %v251
    %v667 = vunpack.c.l.b16 %v252
    %v668 = vunpack.c.h.b16 %v252
    %v669 = vunpack.c.l.b16 %v253
    %v670 = vunpack.c.h.b16 %v253
    %v671 = vunpack.c.l.b16 %v254
    %v672 = vunpack.c.h.b16 %v254
    %v673 = vunpack.c.l.b16 %v255
    %v674 = vunpack.c.h.b16 %v255
    %v675 = vunpack.c.l.b16 %v256
    %v676 = vunpack.c.h.b16 %v256
    %v677 = vunpack.c.l.b16 %v257
    %v678 = vunpack.c.h.b16 %v257
    %v679 = vunpack.c.l.b16 %v258
    %v680 = vunpack.c.h.b16 %v258
    %v681 = vunpack.c.l.b16 %v259
    %v682 = vunpack.c.h.b16 %v259
    %v683 = vunpack.c.l.b16 %v260
    %v684 = vunpack.c.h.b16 %v260
    %v685 = vunpack.c.l.b16 %v261
    %v686 = vunpack.c.h.b16 %v261
    %v687 = vunpack.c.l.b16 %v262
    %v688 = vunpack.c.h.b16 %v262
    %v689 = vunpack.c.l.b16 %v263
    %v690 = vunpack.c.h.b16 %v263
    %v691 = vunpack.c.l.b16 %v264
    %v692 = vunpack.c.h.b16 %v264
    %v693 = vunpack.c.l.b16 %v265
    %v694 = vunpack.c.h.b16 %v265
    %v695 = vunpack.c.l.b16 %v266
    %v696 = vunpack.c.h.b16 %v266
    %v697 = vunpack.c.l.b16 %v267
    %v698 = vunpack.c.h.b16 %v267
    %v699 = vunpack.c.l.b16 %v268
    %v700 = vunpack.c.h.b16 %v268
    %v701 = vunpack.c.l.b16 %v269
    %v702 = vunpack.c.h.b16 %v269
    %v703 = vunpack.c.l.b16 %v270
    %v704 = vunpack.c.h.b16 %v270
    %v705 = vunpack.c.l.b16 %v271
    %v706 = vunpack.c.h.b16 %v271
    %v707 = vunpack.c.l.b16 %v272
    %v708 = vunpack.c.h.b16 %v272
    %v709 = vunpack.c.l.b16 %v273
    %v710 = vunpack.c.h.b16 %v273
    %v711 = vunpack.c.l.b16 %v274
    %v712 = vunpack.c.h.b16 %v274
    %v713 = vunpack.c.l.b16 %v275
    %v714 = vunpack.c.h.b16 %v275
    %v715 = vunpack.c.l.b16 %v276
    %v716 = vunpack.c.h.b16 %v276
    %v717 = vunpack.c.l.b16 %v277
    %v718 = vunpack.c.h.b16 %v277
    %v719 = vunpack.c.l.b16 %v278
    %v720 = vunpack.c.h.b16 %v278
    %v721 = vunpack.c.l.b16 %v279
    %v722 = vunpack.c.h.b16 %v279
    %v723 = vunpack.c.l.b16 %v280
    %v724 = vunpack.c.h.b16 %v280
    %v725 = vunpack.c.l.b16 %v281
    %v726 = vunpack.c.h.b16 %v281
    %v727 = vunpack.c.l.b16 %v282
    %v728 = vunpack.c.h.b16 %v282
    %v729 = vunpack.c.l.b16 %v283
    %v730 = vunpack.c.h.b16 %v283
    %v731 = vunpack.c.l.b16 %v284
    %v732 = vunpack.c.h.b16 %v284
    %v733 = vunpack.c.l.b16 %v285
    %v734 = vunpack.c.h.b16 %v285
    %v735 = vunpack.c.l.b16 %v286
    %v736 = vunpack.c.h.b16 %v286
    %v737 = vunpack.c.l.b16 %v287
    %v738 = vunpack.c.h.b16 %v287
    %v739 = vunpack.c.l.b16 %v288
    %v740 = vunpack.c.h.b16 %v288
    %v741 = vunpack.c.l.b16 %v289
    %v742 = vunpack.c.h.b16 %v289
    %v743 = vunpack.c.l.b16 %v290
    %v744 = vunpack.c.h.b16 %v290
    %v745 = vunpack.c.l.b16 %v291
    %v746 = vunpack.c.h.b16 %v291
    %v747 = vunpack.c.l.b16 %v292
    %v748 = vunpack.c.h.b16 %v292
    %v749 = vunpack.c.l.b16 %v293
    %v750 = vunpack.c.h.b16 %v293
    %v751 = vunpack.c.l.b16 %v294
    %v752 = vunpack.c.h.b16 %v294
    %v753 = vunpack.c.l.b16 %v295
    %v754 = vunpack.c.h.b16 %v295
    %v755 = vunpack.c.l.b16 %v296
    %v756 = vunpack.c.h.b16 %v296
    %v757 = vunpack.c.l.b16 %v297
    %v758 = vunpack.c.h.b16 %v297
    %v759 = vunpack.c.l.b16 %v298
    %v760 = vunpack.c.h.b16 %v298
    %v761 = vunpack.c.l.b16 %v299
    %v762 = vunpack.c.h.b16 %v299
    %v763 = vunpack.c.l.b16 %v300
    %v764 = vunpack.c.h.b16 %v300
    %v765 = vunpack.c.l.b16 %v301
    %v766 = vunpack.c.h.b16 %v301
    %v767 = vunpack.c.l.b16 %v302
    %v768 = vunpack.c.h.b16 %v302
    %v769 = vunpack.c.l.b16 %v303
    %v770 = vunpack.c.h.b16 %v303
    %v771 = vunpack.c.l.b16 %v304
    %v772 = vunpack.c.h.b16 %v304
    %v773 = vunpack.c.l.b16 %v305
    %v774 = vunpack.c.h.b16 %v305
    %v775 = vunpack.c.l.b16 %v306
    %v776 = vunpack.c.h.b16 %v306
    %v777 = vunpack.c.l.b16 %v307
    %v778 = vunpack.c.h.b16 %v307
    %v779 = vunpack.c.l.b16 %v308
    %v780 = vunpack.c.h.b16 %v308
    %v781 = vunpack.c.l.b16 %v309
    %v782 = vunpack.c.h.b16 %v309
    %v783 = vunpack.c.l.b16 %v310
    %v784 = vunpack.c.h.b16 %v310
    %v785 = vunpack.c.l.b16 %v311
    %v786 = vunpack.c.h.b16 %v311
    %v787 = vunpack.c.l.b16 %v312
    %v788 = vunpack.c.h.b16 %v312
    %v789 = vunpack.c.l.b16 %v313
    %v790 = vunpack.c.h.b16 %v313
    %v791 = vunpack.c.l.b16 %v314
    %v792 = vunpack.c.h.b16 %v314
    %v793 = vunpack.c.l.b16 %v315
    %v794 = vunpack.c.h.b16 %v315
    %v795 = vunpack.c.l.b16 %v316
    %v796 = vunpack.c.h.b16 %v316
    %v797 = vunpack.c.l.b16 %v317
    %v798 = vunpack.c.h.b16 %v317
    %v799 = vunpack.c.l.b16 %v318
    %v800 = vunpack.c.h.b16 %v318
    %v801 = vunpack.c.l.b16 %v319
    %v802 = vunpack.c.h.b16 %v319
    %v803 = vunpack.c.l.b16 %v320
    %v804 = vunpack.c.h.b16 %v320
    %v805 = vunpack.c.l.b16 %v321
    %v806 = vunpack.c.h.b16 %v321
    %v807 = vunpack.c.l.b16 %v322
    %v808 = vunpack.c.h.b16 %v322
    %v809 = vunpack.c.l.b16 %v323
    %v810 = vunpack.c.h.b16 %v323
    %v811 = vunpack.c.l.b16 %v324
    %v812 = vunpack.c.h.b16 %v324
    %v813 = vunpack.c.l.b16 %v325
    %v814 = vunpack.c.h.b16 %v325
    %v815 = vunpack.c.l.b16 %v326
    %v816 = vunpack.c.h.b16 %v326
    %v817 = vunpack.c.l.b16 %v327
    %v818 = vunpack.c.h.b16 %v327
    %v819 = vunpack.c.l.b16 %v328
    %v820 = vunpack.c.h.b16 %v328
    %v821 = vunpack.c.l.b16 %v329
    %v822 = vunpack.c.h.b16 %v329
    %v823 = vunpack.c.l.b16 %v330
    %v824 = vunpack.c.h.b16 %v330
    %v825 = vunpack.c.l.b16 %v331
    %v826 = vunpack.c.h.b16 %v331
    %v827 = vunpack.c.l.b16 %v332
    %v828 = vunpack.c.h.b16 %v332
    %v829 = vunpack.c.l.b16 %v333
    %v830 = vunpack.c.h.b16 %v333
    %v831 = vunpack.c.l.b16 %v334
    %v832 = vunpack.c.h.b16 %v334
    %v833 = vunpack.c.l.b16 %v335
    %v834 = vunpack.c.h.b16 %v335
    %v835 = vunpack.c.l.b16 %v336
    %v836 = vunpack.c.h.b16 %v336
    %v837 = vunpack.c.l.b16 %v337
    %v838 = vunpack.c.h.b16 %v337
    %v839 = vunpack.c.l.b16 %v338
    %v840 = vunpack.c.h.b16 %v338
    %v841 = vunpack.c.l.b16 %v339
    %v842 = vunpack.c.h.b16 %v339
    %v843 = vunpack.c.l.b16 %v340
    %v844 = vunpack.c.h.b16 %v340
    %v845 = vunpack.c.l.b16 %v341
    %v846 = vunpack.c.h.b16 %v341
    %v847 = vunpack.c.l.b16 %v342
    %v848 = vunpack.c.h.b16 %v342
    %v849 = vunpack.c.l.b16 %v343
    %v850 = vunpack.c.h.b16 %v343
    %v851 = vunpack.c.l.b16 %v344
    %v852 = vunpack.c.h.b16 %v344
    %v853 = vunpack.c.l.b16 %v345
    %v854 = vunpack.c.h.b16 %v345
    %v855 = vunpack.c.l.b16 %v346
    %v856 = vunpack.c.h.b16 %v346
    %v857 = vunpack.c.l.b16 %v347
    %v858 = vunpack.c.h.b16 %v347
    %v859 = vunpack.c.l.b16 %v348
    %v860 = vunpack.c.h.b16 %v348
    %v861 = vunpack.c.l.b16 %v349
    %v862 = vunpack.c.h.b16 %v349
    %v863 = vunpack.c.l.b16 %v350
    %v864 = vunpack.c.h.b16 %v350
    %v865 = vunpack.c.l.b16 %v351
    %v866 = vunpack.c.h.b16 %v351
    %v867 = vunpack.c.l.b16 %v352
    %v868 = vunpack.c.h.b16 %v352
    %v869 = vunpack.c.l.b16 %v353
    %v870 = vunpack.c.h.b16 %v353
    %v871 = vunpack.c.l.b16 %v354
    %v872 = vunpack.c.h.b16 %v354
    %v873 = vunpack.c.l.b16 %v355
    %v874 = vunpack.c.h.b16 %v355
    %v875 = vunpack.c.l.b16 %v356
    %v876 = vunpack.c.h.b16 %v356
    %v877 = vunpack.c.l.b16 %v357
    %v878 = vunpack.c.h.b16 %v357
    %v879 = vunpack.c.l.b16 %v358
    %v880 = vunpack.c.h.b16 %v358
    %v881 = vunpack.c.l.b16 %v359
    %v882 = vunpack.c.h.b16 %v359
    %v883 = vunpack.c.l.b16 %v360
    %v884 = vunpack.c.h.b16 %v360
    %v885 = vunpack.c.l.b16 %v361
    %v886 = vunpack.c.h.b16 %v361
    %v887 = vunpack.c.l.b16 %v362
    %v888 = vunpack.c.h.b16 %v362
    %v889 = vunpack.c.l.b16 %v363
    %v890 = vunpack.c.h.b16 %v363
    %v891 = vunpack.c.l.b16 %v364
    %v892 = vunpack.c.h.b16 %v364
    %v893 = vunpack.c.l.b16 %v365
    %v894 = vunpack.c.h.b16 %v365
    %v895 = vunpack.c.l.b16 %v366
    %v896 = vunpack.c.h.b16 %v366
    %v897 = vunpack.c.l.b16 %v367
    %v898 = vunpack.c.h.b16 %v367
    %v899 = vunpack.c.l.b16 %v368
    %v900 = vunpack.c.h.b16 %v368
    %v901 = vunpack.c.l.b16 %v369
    %v902 = vunpack.c.h.b16 %v369
    %v903 = vunpack.c.l.b16 %v370
    %v904 = vunpack.c.h.b16 %v370
    %v905 = vunpack.c.l.b16 %v371
    %v906 = vunpack.c.h.b16 %v371
    %v907 = vunpack.c.l.b16 %v372
    %v908 = vunpack.c.h.b16 %v372
    %v909 = vunpack.c.l.b16 %v373
    %v910 = vunpack.c.h.b16 %v373
    %v911 = vunpack.c.l.b16 %v374
    %v912 = vunpack.c.h.b16 %v374
    %v913 = vunpack.c.l.b16 %v375
    %v914 = vunpack.c.h.b16 %v375
    %v915 = vunpack.c.l.b16 %v376
    %v916 = vunpack.c.h.b16 %v376
    %v917 = vunpack.c.l.b16 %v377
    %v918 = vunpack.c.h.b16 %v377
    %v919 = vunpack.c.l.b16 %v378
    %v920 = vunpack.c.h.b16 %v378
    %v921 = vunpack.c.l.b16 %v379
    %v922 = vunpack.c.h.b16 %v379
    %v923 = vunpack.c.l.b16 %v380
    %v924 = vunpack.c.h.b16 %v380
    %v925 = vunpack.c.l.b16 %v381
    %v926 = vunpack.c.h.b16 %v381
    %v927 = vunpack.c.l.b16 %v382
    %v928 = vunpack.c.h.b16 %v382
    %v929 = vunpack.c.l.b16 %v383
    %v930 = vunpack.c.h.b16 %v383
    %v931 = vunpack.c.l.b16 %v384
    %v932 = vunpack.c.h.b16 %v384
    %v933 = vunpack.c.l.b16 %v385
    %v934 = vunpack.c.h.b16 %v385
    %v935 = vunpack.c.l.b16 %v386
    %v936 = vunpack.c.h.b16 %v386
    %v937 = vunpack.c.l.b16 %v387
    %v938 = vunpack.c.h.b16 %v387
    %v939 = vunpack.c.l.b16 %v388
    %v940 = vunpack.c.h.b16 %v388
    %v941 = vunpack.c.l.b16 %v389
    %v942 = vunpack.c.h.b16 %v389
    %v943 = vunpack.c.l.b16 %v390
    %v944 = vunpack.c.h.b16 %v390
    %v945 = vunpack.c.l.b16 %v391
    %v946 = vunpack.c.h.b16 %v391
    %v947 = vunpack.c.l.b16 %v392
    %v948 = vunpack.c.h.b16 %v392
    %v949 = vunpack.c.l.b16 %v393
    %v950 = vunpack.c.h.b16 %v393
    %v951 = vunpack.c.l.b16 %v394
    %v952 = vunpack.c.h.b16 %v394
    %v953 = vunpack.c.l.b16 %v395
    %v954 = vunpack.c.h.b16 %v395
    %v955 = vunpack.c.l.b16 %v396
    %v956 = vunpack.c.h.b16 %v396
    %v957 = vunpack.c.l.b16 %v397
    %v958 = vunpack.c.h.b16 %v397
    %v959 = vunpack.c.l.b16 %v398
    %v960 = vunpack.c.h.b16 %v398
    %v961 = vunpack.c.l.b16 %v399
    %v962 = vunpack.c.h.b16 %v399
    %v963 = vunpack.c.l.b16 %v400
    %v964 = vunpack.c.h.b16 %v400
    %v965 = vunpack.c.l.b16 %v401
    %v966 = vunpack.c.h.b16 %v401
    %v967 = vunpack.c.l.b16 %v402
    %v968 = vunpack.c.h.b16 %v402
    %v969 = vunpack.c.l.b16 %v403
    %v970 = vunpack.c.h.b16 %v403
    %v971 = vunpack.c.l.b16 %v404
    %v972 = vunpack.c.h.b16 %v404
    %v973 = vunpack.c.l.b16 %v405
    %v974 = vunpack.c.h.b16 %v405
    %v975 = vunpack.c.l.b16 %v406
    %v976 = vunpack.c.h.b16 %v406
    %v977 = vunpack.c.l.b16 %v407
    %v978 = vunpack.c.h.b16 %v407
    %v979 = vunpack.c.l.b16 %v408
    %v980 = vunpack.c.h.b16 %v408
    %v981 = vunpack.c.l.b16 %v409
    %v982 = vunpack.c.h.b16 %v409
    %v983 = vunpack.c.l.b16 %v410
    %v984 = vunpack.c.h.b16 %v410
    %v985 = vunpack.c.l.b16 %v411
    %v986 = vunpack.c.h.b16 %v411
    %v987 = vunpack.c.l.b16 %v412
    %v988 = vunpack.c.h.b16 %v412
    %v989 = vunpack.c.l.b16 %v413
    %v990 = vunpack.c.h.b16 %v413
    %v991 = vunpack.c.l.b16 %v414
    %v992 = vunpack.c.h.b16 %v414
    %v993 = vunpack.c.l.b16 %v415
    %v994 = vunpack.c.h.b16 %v415
    %v995 = vunpack.c.l.b16 %v416
    %v996 = vunpack.c.h.b16 %v416
    %v997 = vunpack.c.l.b16 %v417
    %v998 = vunpack.c.h.b16 %v417
    %v999 = vunpack.c.l.b16 %v418
    %v1000 = vunpack.c.h.b16 %v418
    %v1001 = vunpack.c.l.b16 %v419
    %v1002 = vunpack.c.h.b16 %v419
    %v1003 = vunpack.c.l.b16 %v420
    %v1004 = vunpack.c.h.b16 %v420
    %v1005 = vunpack.c.l.b16 %v421
    %v1006 = vunpack.c.h.b16 %v421
    %v1007 = vunpack.c.l.b16 %v422
    %v1008 = vunpack.c.h.b16 %v422
    %v1009 = vunpack.c.l.b16 %v423
    %v1010 = vunpack.c.h.b16 %v423
    %v1011 = vunpack.c.l.b16 %v424
    %v1012 = vunpack.c.h.b16 %v424
    %v1013 = vunpack.c.l.b16 %v425
    %v1014 = vunpack.c.h.b16 %v425
    %v1015 = vunpack.c.l.b16 %v426
    %v1016 = vunpack.c.h.b16 %v426
    %v1017 = vunpack.c.l.b16 %v427
    %v1018 = vunpack.c.h.b16 %v427
    %v1019 = vunpack.c.l.b16 %v428
    %v1020 = vunpack.c.h.b16 %v428
    %v1021 = vunpack.c.l.b16 %v429
    %v1022 = vunpack.c.h.b16 %v429
    %v1023 = vunpack.c.l.b16 %v430
    %v1024 = vunpack.c.h.b16 %v430
    %v1025 = vunpack.c.l.b16 %v431
    %v1026 = vunpack.c.h.b16 %v431
    %v1027 = vunpack.c.l.b16 %v432
    %v1028 = vunpack.c.h.b16 %v432
    %v1029 = vunpack.c.l.b16 %v433
    %v1030 = vunpack.c.h.b16 %v433
    %v1031 = vunpack.c.l.b16 %v434
    %v1032 = vunpack.c.h.b16 %v434
    %v1033 = vunpack.c.l.b16 %v435
    %v1034 = vunpack.c.h.b16 %v435
    %v1035 = vunpack.c.l.b16 %v436
    %v1036 = vunpack.c.h.b16 %v436
    %v1037 = vunpack.c.l.b16 %v437
    %v1038 = vunpack.c.h.b16 %v437
    %v1039 = vunpack.c.l.b16 %v438
    %v1040 = vunpack.c.h.b16 %v438
    %v1041 = vunpack.c.l.b16 %v439
    %v1042 = vunpack.c.h.b16 %v439
    %v1043 = vunpack.c.l.b16 %v440
    %v1044 = vunpack.c.h.b16 %v440
    %v1045 = vunpack.c.l.b16 %v441
    %v1046 = vunpack.c.h.b16 %v441
    %v1047 = vunpack.c.l.b16 %v442
    %v1048 = vunpack.c.h.b16 %v442
    %v1049 = vunpack.c.l.b16 %v443
    %v1050 = vunpack.c.h.b16 %v443
    %v1051 = vunpack.c.l.b16 %v444
    %v1052 = vunpack.c.h.b16 %v444
    %v1053 = vunpack.c.l.b16 %v445
    %v1054 = vunpack.c.h.b16 %v445
    %v1055 = vunpack.c.l.b16 %v446
    %v1056 = vunpack.c.h.b16 %v446
    %v1057 = vpack.c.b16 %v669, %v665
    %v1058 = vpack.c.b16 %v670, %v666
    %v1059 = vpack.c.b16 %v671, %v667
    %v1060 = vpack.c.b16 %v672, %v668
    %v1061 = vpack.c.b16 %v677, %v673
    %v1062 = vpack.c.b16 %v678, %v674
    %v1063 = vpack.c.b16 %v679, %v675
    %v1064 = vpack.c.b16 %v680, %v676
    %v1065 = vpack.c.b16 %v685, %v681
    %v1066 = vpack.c.b16 %v686, %v682
    %v1067 = vpack.c.b16 %v687, %v683
    %v1068 = vpack.c.b16 %v688, %v684
    %v1069 = vpack.c.b16 %v693, %v689
    %v1070 = vpack.c.b16 %v694, %v690
    %v1071 = vpack.c.b16 %v695, %v691
    %v1072 = vpack.c.b16 %v696, %v692
    %v1073 = vpack.c.b16 %v701, %v697
    %v1074 = vpack.c.b16 %v702, %v698
    %v1075 = vpack.c.b16 %v703, %v699
    %v1076 = vpack.c.b16 %v704, %v700
    %v1077 = vpack.c.b16 %v709, %v705
    %v1078 = vpack.c.b16 %v710, %v706
    %v1079 = vpack.c.b16 %v711, %v707
    %v1080 = vpack.c.b16 %v712, %v708
    %v1081 = vpack.c.b16 %v717, %v713
    %v1082 = vpack.c.b16 %v718, %v714
    %v1083 = vpack.c.b16 %v719, %v715
    %v1084 = vpack.c.b16 %v720, %v716
    %v1085 = vpack.c.b16 %v725, %v721
    %v1086 = vpack.c.b16 %v726, %v722
    %v1087 = vpack.c.b16 %v727, %v723
    %v1088 = vpack.c.b16 %v728, %v724
    %v1089 = vpack.c.b16 %v733, %v729
    %v1090 = vpack.c.b16 %v734, %v730
    %v1091 = vpack.c.b16 %v735, %v731
    %v1092 = vpack.c.b16 %v736, %v732
    %v1093 = vpack.c.b16 %v741, %v737
    %v1094 = vpack.c.b16 %v742, %v738
    %v1095 = vpack.c.b16 %v743, %v739
    %v1096 = vpack.c.b16 %v744, %v740
    %v1097 = vpack.c.b16 %v749, %v745
    %v1098 = vpack.c.b16 %v750, %v746
    %v1099 = vpack.c.b16 %v751, %v747
    %v1100 = vpack.c.b16 %v752, %v748
    %v1101 = vpack.c.b16 %v757, %v753
    %v1102 = vpack.c.b16 %v758, %v754
    %v1103 = vpack.c.b16 %v759, %v755
    %v1104 = vpack.c.b16 %v760, %v756
    %v1105 = vpack.c.b16 %v765, %v761
    %v1106 = vpack.c.b16 %v766, %v762
    %v1107 = vpack.c.b16 %v767, %v763
    %v1108 = vpack.c.b16 %v768, %v764
    %v1109 = vpack.c.b16 %v773, %v769
    %v1110 = vpack.c.b16 %v774, %v770
    %v1111 = vpack.c.b16 %v775, %v771
    %v1112 = vpack.c.b16 %v776, %v772
    %v1113 = vpack.c.b16 %v781, %v777
    %v1114 = vpack.c.b16 %v782, %v778
    %v1115 = vpack.c.b16 %v783, %v779
    %v1116 = vpack.c.b16 %v784, %v780
    %v1117 = vpack.c.b16 %v789, %v785
    %v1118 = vpack.c.b16 %v790, %v786
    %v1119 = vpack.c.b16 %v791, %v787
    %v1120 = vpack.c.b16 %v792, %v788
    %v1121 = vpack.c.b16 %v797, %v793
    %v1122 = vpack.c.b16 %v798, %v794
    %v1123 = vpack.c.b16 %v799, %v795
    %v1124 = vpack.c.b16 %v800, %v796
    %v1125 = vpack.c.b16 %v805, %v801
    %v1126 = vpack.c.b16 %v806, %v802
    %v1127 = vpack.c.b16 %v807, %v803
    %v1128 = vpack.c.b16 %v808, %v804
    %v1129 = vpack.c.b16 %v813, %v809
    %v1130 = vpack.c.b16 %v814, %v810
    %v1131 = vpack.c.b16 %v815, %v811
    %v1132 = vpack.c.b16 %v816, %v812
    %v1133 = vpack.c.b16 %v821, %v817
    %v1134 = vpack.c.b16 %v822, %v818
    %v1135 = vpack.c.b16 %v823, %v819
    %v1136 = vpack.c.b16 %v824, %v820
    %v1137 = vpack.c.b16 %v829, %v825
    %v1138 = vpack.c.b16 %v830, %v826
    %v1139 = vpack.c.b16 %v831, %v827
    %v1140 = vpack.c.b16 %v832, %v828
    %v1141 = vpack.c.b16 %v837, %v833
    %v1142 = vpack.c.b16 %v838, %v834
    %v1143 = vpack.c.b16 %v839, %v835
    %v1144 = vpack.c.b16 %v840, %v836
    %v1145 = vpack.c.b16 %v845, %v841
    %v1146 = vpack.c.b16 %v846, %v842
    %v1147 = vpack.c.b16 %v847, %v843
    %v1148 = vpack.c.b16 %v848, %v844
    %v1149 = vpack.c.b16 %v853, %v849
    %v1150 = vpack.c.b16 %v854, %v850
    %v1151 = vpack.c.b16 %v855, %v851
    %v1152 = vpack.c.b16 %v856, %v852
    %v1153 = vpack.c.b16 %v861, %v857
    %v1154 = vpack.c.b16 %v862, %v858
    %v1155 = vpack.c.b16 %v863, %v859
    %v1156 = vpack.c.b16 %v864, %v860
    %v1157 = vpack.c.b16 %v869, %v865
    %v1158 = vpack.c.b16 %v870, %v866
    %v1159 = vpack.c.b16 %v871, %v867
    %v1160 = vpack.c.b16 %v872, %v868
    %v1161 = vpack.c.b16 %v877, %v873
    %v1162 = vpack.c.b16 %v878, %v874
    %v1163 = vpack.c.b16 %v879, %v875
    %v1164 = vpack.c.b16 %v880, %v876
    %v1165 = vpack.c.b16 %v885, %v881
    %v1166 = vpack.c.b16 %v886, %v882
    %v1167 = vpack.c.b16 %v887, %v883
    %v1168 = vpack.c.b16 %v888, %v884
    %v1169 = vpack.c.b16 %v893, %v889
    %v1170 = vpack.c.b16 %v894, %v890
    %v1171 = vpack.c.b16 %v895, %v891
    %v1172 = vpack.c.b16 %v896, %v892
    %v1173 = vpack.c.b16 %v901, %v897
    %v1174 = vpack.c.b16 %v902, %v898
    %v1175 = vpack.c.b16 %v903, %v899
    %v1176 = vpack.c.b16 %v904, %v900
    %v1177 = vpack.c.b16 %v909, %v905
    %v1178 = vpack.c.b16 %v910, %v906
    %v1179 = vpack.c.b16 %v911, %v907
    %v1180 = vpack.c.b16 %v912, %v908
    %v1181 = vpack.c.b16 %v917, %v913
    %v1182 = vpack.c.b16 %v918, %v914
    %v1183 = vpack.c.b16 %v919, %v915
    %v1184 = vpack.c.b16 %v920, %v916
    %v1185 = vpack.c.b16 %v925, %v921
    %v1186 = vpack.c.b16 %v926, %v922
    %v1187 = vpack.c.b16 %v927, %v923
    %v1188 = vpack.c.b16 %v928, %v924
    %v1189 = vpack.c.b16 %v933, %v929
    %v1190 = vpack.c.b16 %v934, %v930
    %v1191 = vpack.c.b16 %v935, %v931
    %v1192 = vpack.c.b16 %v936, %v932
    %v1193 = vpack.c.b16 %v941, %v937
    %v1194 = vpack.c.b16 %v942, %v938
    %v1195 = vpack.c.b16 %v943, %v939
    %v1196 = vpack.c.b16 %v944, %v940
    %v1197 = vpack.c.b16 %v949, %v945
    %v1198 = vpack.c.b16 %v950, %v946
    %v1199 = vpack.c.b16 %v951, %v947
    %v1200 = vpack.c.b16 %v952, %v948
    %v1201 = vpack.c.b16 %v957, %v953
    %v1202 = vpack.c.b16 %v958, %v954
    %v1203 = vpack.c.b16 %v959, %v955
    %v1204 = vpack.c.b16 %v960, %v956
    %v1205 = vpack.c.b16 %v965, %v961
    %v1206 = vpack.c.b16 %v966, %v962
    %v1207 = vpack.c.b16 %v967, %v963
    %v1208 = vpack.c.b16 %v968, %v964
    %v1209 = vpack.c.b16 %v973, %v969
    %v1210 = vpack.c.b16 %v974, %v970
    %v1211 = vpack.c.b16 %v975, %v971
    %v1212 = vpack.c.b16 %v976, %v972
    %v1213 = vpack.c.b16 %v981, %v977
    %v1214 = vpack.c.b16 %v982, %v978
    %v1215 = vpack.c.b16 %v983, %v979
    %v1216 = vpack.c.b16 %v984, %v980
    %v1217 = vpack.c.b16 %v989, %v985
    %v1218 = vpack.c.b16 %v990, %v986
    %v1219 = vpack.c.b16 %v991, %v987
    %v1220 = vpack.c.b16 %v992, %v988
    %v1221 = vpack.c.b16 %v997, %v993
    %v1222 = vpack.c.b16 %v998, %v994
    %v1223 = vpack.c.b16 %v999, %v995
    %v1224 = vpack.c.b16 %v1000, %v996
    %v1225 = vpack.c.b16 %v1005, %v1001
    %v1226 = vpack.c.b16 %v1006, %v1002
    %v1227 = vpack.c.b16 %v1007, %v1003
    %v1228 = vpack.c.b16 %v1008, %v1004
    %v1229 = vpack.c.b16 %v1013, %v1009
    %v1230 = vpack.c.b16 %v1014, %v1010
    %v1231 = vpack.c.b16 %v1015, %v1011
    %v1232 = vpack.c.b16 %v1016, %v1012
    %v1233 = vpack.c.b16 %v1021, %v1017
    %v1234 = vpack.c.b16 %v1022, %v1018
    %v1235 = vpack.c.b16 %v1023, %v1019
    %v1236 = vpack.c.b16 %v1024, %v1020
    %v1237 = vpack.c.b16 %v1029, %v1025
    %v1238 = vpack.c.b16 %v1030, %v1026
    %v1239 = vpack.c.b16 %v1031, %v1027
    %v1240 = vpack.c.b16 %v1032, %v1028
    %v1241 = vpack.c.b16 %v1037, %v1033
    %v1242 = vpack.c.b16 %v1038, %v1034
    %v1243 = vpack.c.b16 %v1039, %v1035
    %v1244 = vpack.c.b16 %v1040, %v1036
    %v1245 = vpack.c.b16 %v1045, %v1041
    %v1246 = vpack.c.b16 %v1046, %v1042
    %v1247 = vpack.c.b16 %v1047, %v1043
    %v1248 = vpack.c.b16 %v1048, %v1044
    %v1249 = vpack.c.b16 %v1053, %v1049
    %v1250 = vpack.c.b16 %v1054, %v1050
    %v1251 = vpack.c.b16 %v1055, %v1051
    %v1252 = vpack.c.b16 %v1056, %v1052
    %vm1449 = vcmask 130048
    %v1451 = vsel %vm1449, %v250, 0
    %1453 = vmatprep.subr.bf16.mxu0 %v1058
    %1454 = vmatpush1.bf16.msra.mxu0 %v1057
    %1455 = vmatprep.subr.bf16.mxu0 %v1062
    %1456 = vmatpush1.bf16.msra.mxu0 %v1061
    %1457 = vmatprep.subr.bf16.mxu0 %v1066
    %1458 = vmatpush1.bf16.msra.mxu0 %v1065
    %1459 = vmatprep.subr.bf16.mxu0 %v1070
    %1460 = vmatpush1.bf16.msra.mxu0 %v1069
    %1461 = vmatprep.subr.bf16.mxu0 %v1074
    %1462 = vmatpush1.bf16.msra.mxu0 %v1073
    %1463 = vmatprep.subr.bf16.mxu0 %v1078
    %1464 = vmatpush1.bf16.msra.mxu0 %v1077
    %1465 = vmatprep.subr.bf16.mxu0 %v1082
    %1466 = vmatpush1.bf16.msra.mxu0 %v1081
    %1467 = vmatprep.subr.bf16.mxu0 %v1086
    %1468 = vmatpush1.bf16.msra.mxu0 %v1085
    %1469 = vmatprep.subr.bf16.mxu0 %v1090
    %1470 = vmatpush1.bf16.msra.mxu0 %v1089
    %1471 = vmatprep.subr.bf16.mxu0 %v1094
    %1472 = vmatpush1.bf16.msra.mxu0 %v1093
    %1473 = vmatprep.subr.bf16.mxu0 %v1098
    %1474 = vmatpush1.bf16.msra.mxu0 %v1097
    %1475 = vmatprep.subr.bf16.mxu0 %v1102
    %1476 = vmatpush1.bf16.msra.mxu0 %v1101
    %1477 = vmatprep.subr.bf16.mxu0 %v1106
    %1478 = vmatpush1.bf16.msra.mxu0 %v1105
    %1479 = vmatprep.subr.bf16.mxu0 %v1110
    %1480 = vmatpush1.bf16.msra.mxu0 %v1109
    %1481 = vmatprep.subr.bf16.mxu0 %v1114
    %1482 = vmatpush1.bf16.msra.mxu0 %v1113
    %1483 = vmatprep.subr.bf16.mxu0 %v1118
    %1484 = vmatpush1.bf16.msra.mxu0 %v1117
    %1485 = vmatprep.mubr.bf16.mxu0 %v245
    %1486 = vmatmul.mubr.bf16.gmra.mrb[0].mxu0 %v244
    %v1487 = vpop.f32.mrb[0].mxu0
    %v1488 = vadd.f32 %v452, %v1487
    %v1489 = vpop.f32.mrb[0].mxu0
    %v1490 = vadd.f32 %v456, %v1489
    %v1491 = vpop.f32.mrb[0].mxu0
    %v1492 = vadd.f32 %v452, %v1491
    %v1493 = vpop.f32.mrb[0].mxu0
    %v1494 = vadd.f32 %v456, %v1493
    %1495 = vdwg.mxu0
    %1496 = vmatprep.subr.bf16.mxu0 %v1122
    %1497 = vmatpush1.bf16.msra.mxu0 %v1121
    %1498 = vmatprep.subr.bf16.mxu0 %v1126
    %1499 = vmatpush1.bf16.msra.mxu0 %v1125
    %1500 = vmatprep.subr.bf16.mxu0 %v1130
    %1501 = vmatpush1.bf16.msra.mxu0 %v1129
    %1502 = vmatprep.subr.bf16.mxu0 %v1134
    %1503 = vmatpush1.bf16.msra.mxu0 %v1133
    %1504 = vmatprep.subr.bf16.mxu0 %v1138
    %1505 = vmatpush1.bf16.msra.mxu0 %v1137
    %1506 = vmatprep.subr.bf16.mxu0 %v1142
    %1507 = vmatpush1.bf16.msra.mxu0 %v1141
    %1508 = vmatprep.subr.bf16.mxu0 %v1146
    %1509 = vmatpush1.bf16.msra.mxu0 %v1145
    %1510 = vmatprep.subr.bf16.mxu0 %v1150
    %1511 = vmatpush1.bf16.msra.mxu0 %v1149
    %1512 = vmatprep.subr.bf16.mxu0 %v1154
    %1513 = vmatpush1.bf16.msra.mxu0 %v1153
    %1514 = vmatprep.subr.bf16.mxu0 %v1158
    %1515 = vmatpush1.bf16.msra.mxu0 %v1157
    %1516 = vmatprep.subr.bf16.mxu0 %v1162
    %1517 = vmatpush1.bf16.msra.mxu0 %v1161
    %1518 = vmatprep.subr.bf16.mxu0 %v1166
    %1519 = vmatpush1.bf16.msra.mxu0 %v1165
    %1520 = vmatprep.subr.bf16.mxu0 %v1170
    %1521 = vmatpush1.bf16.msra.mxu0 %v1169
    %1522 = vmatprep.subr.bf16.mxu0 %v1174
    %1523 = vmatpush1.bf16.msra.mxu0 %v1173
    %1524 = vmatprep.subr.bf16.mxu0 %v1178
    %1525 = vmatpush1.bf16.msra.mxu0 %v1177
    %1526 = vmatprep.subr.bf16.mxu0 %v1182
    %1527 = vmatpush1.bf16.msra.mxu0 %v1181
    %1528 = vmatprep.mubr.bf16.mxu0 %v247
    %1529 = vmatmul.mubr.bf16.gmra.mrb[0].mxu0 %v246
    %v1530 = vpop.f32.mrb[0].mxu0
    %v1531 = vadd.f32 %v1488, %v1530
    %v1532 = vpop.f32.mrb[0].mxu0
    %v1533 = vadd.f32 %v1490, %v1532
    %v1534 = vpop.f32.mrb[0].mxu0
    %v1535 = vadd.f32 %v1492, %v1534
    %v1536 = vpop.f32.mrb[0].mxu0
    %v1537 = vadd.f32 %v1494, %v1536
    %1538 = vdwg.mxu0
    %1539 = vmatprep.subr.bf16.mxu0 %v1186
    %1540 = vmatpush1.bf16.msra.mxu0 %v1185
    %1541 = vmatprep.subr.bf16.mxu0 %v1190
    %1542 = vmatpush1.bf16.msra.mxu0 %v1189
    %1543 = vmatprep.subr.bf16.mxu0 %v1194
    %1544 = vmatpush1.bf16.msra.mxu0 %v1193
    %1545 = vmatprep.subr.bf16.mxu0 %v1198
    %1546 = vmatpush1.bf16.msra.mxu0 %v1197
    %1547 = vmatprep.subr.bf16.mxu0 %v1202
    %1548 = vmatpush1.bf16.msra.mxu0 %v1201
    %1549 = vmatprep.subr.bf16.mxu0 %v1206
    %1550 = vmatpush1.bf16.msra.mxu0 %v1205
    %1551 = vmatprep.subr.bf16.mxu0 %v1210
    %1552 = vmatpush1.bf16.msra.mxu0 %v1209
    %1553 = vmatprep.subr.bf16.mxu0 %v1214
    %1554 = vmatpush1.bf16.msra.mxu0 %v1213
    %1555 = vmatprep.subr.bf16.mxu0 %v1218
    %1556 = vmatpush1.bf16.msra.mxu0 %v1217
    %1557 = vmatprep.subr.bf16.mxu0 %v1222
    %1558 = vmatpush1.bf16.msra.mxu0 %v1221
    %1559 = vmatprep.subr.bf16.mxu0 %v1226
    %1560 = vmatpush1.bf16.msra.mxu0 %v1225
    %1561 = vmatprep.subr.bf16.mxu0 %v1230
    %1562 = vmatpush1.bf16.msra.mxu0 %v1229
    %1563 = vmatprep.subr.bf16.mxu0 %v1234
    %1564 = vmatpush1.bf16.msra.mxu0 %v1233
    %1565 = vmatprep.subr.bf16.mxu0 %v1238
    %1566 = vmatpush1.bf16.msra.mxu0 %v1237
    %1567 = vmatprep.subr.bf16.mxu0 %v1242
    %1568 = vmatpush1.bf16.msra.mxu0 %v1241
    %1569 = vmatprep.subr.bf16.mxu0 %v1246
    %1570 = vmatpush1.bf16.msra.mxu0 %v1245
    %1571 = vmatprep.mubr.bf16.mxu0 %v249
    %1572 = vmatmul.mubr.bf16.gmra.mrb[0].mxu0 %v248
    %v1573 = vpop.f32.mrb[0].mxu0
    %v1574 = vadd.f32 %v1531, %v1573
    %v1575 = vpop.f32.mrb[0].mxu0
    %v1576 = vadd.f32 %v1533, %v1575
    %v1577 = vpop.f32.mrb[0].mxu0
    %v1578 = vadd.f32 %v1535, %v1577
    %v1579 = vpop.f32.mrb[0].mxu0
    %v1580 = vadd.f32 %v1537, %v1579
    %1581 = vdwg.mxu0
    %1582 = vmatprep.subr.bf16.mxu0 %v1250
    %1583 = vmatpush1.bf16.msra.mxu0 %v1249
    %1584 = vmatprep.subr.bf16.mxu0 0
    %1585 = vmatpush1.bf16.msra.mxu0 0
    %1586 = vmatprep.subr.bf16.mxu0 0
    %1587 = vmatpush1.bf16.msra.mxu0 0
    %1588 = vmatprep.subr.bf16.mxu0 0
    %1589 = vmatpush1.bf16.msra.mxu0 0
    %1590 = vmatprep.subr.bf16.mxu0 0
    %1591 = vmatpush1.bf16.msra.mxu0 0
    %1592 = vmatprep.subr.bf16.mxu0 0
    %1593 = vmatpush1.bf16.msra.mxu0 0
    %1594 = vmatprep.subr.bf16.mxu0 0
    %1595 = vmatpush1.bf16.msra.mxu0 0
    %1596 = vmatprep.subr.bf16.mxu0 0
    %1597 = vmatpush1.bf16.msra.mxu0 0
    %1598 = vmatprep.subr.bf16.mxu0 0
    %1599 = vmatpush1.bf16.msra.mxu0 0
    %1600 = vmatprep.subr.bf16.mxu0 0
    %1601 = vmatpush1.bf16.msra.mxu0 0
    %1602 = vmatprep.subr.bf16.mxu0 0
    %1603 = vmatpush1.bf16.msra.mxu0 0
    %1604 = vmatprep.subr.bf16.mxu0 0
    %1605 = vmatpush1.bf16.msra.mxu0 0
    %1606 = vmatprep.subr.bf16.mxu0 0
    %1607 = vmatpush1.bf16.msra.mxu0 0
    %1608 = vmatprep.subr.bf16.mxu0 0
    %1609 = vmatpush1.bf16.msra.mxu0 0
    %1610 = vmatprep.subr.bf16.mxu0 0
    %1611 = vmatpush1.bf16.msra.mxu0 0
    %1612 = vmatprep.subr.bf16.mxu0 0
    %1613 = vmatpush1.bf16.msra.mxu0 0
    %1614 = vmatprep.mubr.bf16.mxu0 0
    %1615 = vmatmul.mubr.bf16.gmra.mrb[0].mxu0 %v1451
    %v1616 = vpop.f32.mrb[0].mxu0
    %v1617 = vadd.f32 %v1574, %v1616
    %v1618 = vpop.f32.mrb[0].mxu0
    %v1619 = vadd.f32 %v1576, %v1618
    %v1620 = vpop.f32.mrb[0].mxu0
    %v1621 = vadd.f32 %v1578, %v1620
    %v1622 = vpop.f32.mrb[0].mxu0
    %v1623 = vadd.f32 %v1580, %v1622
    %1624 = vdwg.mxu0
    %1625 = vmatprep.subr.bf16.mxu0 %v1060
    %1626 = vmatpush1.bf16.msra.mxu0 %v1059
    %1627 = vmatprep.subr.bf16.mxu0 %v1064
    %1628 = vmatpush1.bf16.msra.mxu0 %v1063
    %1629 = vmatprep.subr.bf16.mxu0 %v1068
    %1630 = vmatpush1.bf16.msra.mxu0 %v1067
    %1631 = vmatprep.subr.bf16.mxu0 %v1072
    %1632 = vmatpush1.bf16.msra.mxu0 %v1071
    %1633 = vmatprep.subr.bf16.mxu0 %v1076
    %1634 = vmatpush1.bf16.msra.mxu0 %v1075
    %1635 = vmatprep.subr.bf16.mxu0 %v1080
    %1636 = vmatpush1.bf16.msra.mxu0 %v1079
    %1637 = vmatprep.subr.bf16.mxu0 %v1084
    %1638 = vmatpush1.bf16.msra.mxu0 %v1083
    %1639 = vmatprep.subr.bf16.mxu0 %v1088
    %1640 = vmatpush1.bf16.msra.mxu0 %v1087
    %1641 = vmatprep.subr.bf16.mxu0 %v1092
    %1642 = vmatpush1.bf16.msra.mxu0 %v1091
    %1643 = vmatprep.subr.bf16.mxu0 %v1096
    %1644 = vmatpush1.bf16.msra.mxu0 %v1095
    %1645 = vmatprep.subr.bf16.mxu0 %v1100
    %1646 = vmatpush1.bf16.msra.mxu0 %v1099
    %1647 = vmatprep.subr.bf16.mxu0 %v1104
    %1648 = vmatpush1.bf16.msra.mxu0 %v1103
    %1649 = vmatprep.subr.bf16.mxu0 %v1108
    %1650 = vmatpush1.bf16.msra.mxu0 %v1107
    %1651 = vmatprep.subr.bf16.mxu0 %v1112
    %1652 = vmatpush1.bf16.msra.mxu0 %v1111
    %1653 = vmatprep.subr.bf16.mxu0 %v1116
    %1654 = vmatpush1.bf16.msra.mxu0 %v1115
    %1655 = vmatprep.subr.bf16.mxu0 %v1120
    %1656 = vmatpush1.bf16.msra.mxu0 %v1119
    %1657 = vmatprep.mubr.bf16.mxu0 %v245
    %1658 = vmatmul.mubr.bf16.gmra.mrb[0].mxu0 %v244
    %v1659 = vpop.f32.mrb[0].mxu0
    %v1660 = vadd.f32 %v460, %v1659
    %v1661 = vpop.f32.mrb[0].mxu0
    %v1662 = vadd.f32 %v464, %v1661
    %v1663 = vpop.f32.mrb[0].mxu0
    %v1664 = vadd.f32 %v460, %v1663
    %v1665 = vpop.f32.mrb[0].mxu0
    %v1666 = vadd.f32 %v464, %v1665
    %1667 = vdwg.mxu0
    %1668 = vmatprep.subr.bf16.mxu0 %v1124
    %1669 = vmatpush1.bf16.msra.mxu0 %v1123
    %1670 = vmatprep.subr.bf16.mxu0 %v1128
    %1671 = vmatpush1.bf16.msra.mxu0 %v1127
    %1672 = vmatprep.subr.bf16.mxu0 %v1132
    %1673 = vmatpush1.bf16.msra.mxu0 %v1131
    %1674 = vmatprep.subr.bf16.mxu0 %v1136
    %1675 = vmatpush1.bf16.msra.mxu0 %v1135
    %1676 = vmatprep.subr.bf16.mxu0 %v1140
    %1677 = vmatpush1.bf16.msra.mxu0 %v1139
    %1678 = vmatprep.subr.bf16.mxu0 %v1144
    %1679 = vmatpush1.bf16.msra.mxu0 %v1143
    %1680 = vmatprep.subr.bf16.mxu0 %v1148
    %1681 = vmatpush1.bf16.msra.mxu0 %v1147
    %1682 = vmatprep.subr.bf16.mxu0 %v1152
    %1683 = vmatpush1.bf16.msra.mxu0 %v1151
    %1684 = vmatprep.subr.bf16.mxu0 %v1156
    %1685 = vmatpush1.bf16.msra.mxu0 %v1155
    %1686 = vmatprep.subr.bf16.mxu0 %v1160
    %1687 = vmatpush1.bf16.msra.mxu0 %v1159
    %1688 = vmatprep.subr.bf16.mxu0 %v1164
    %1689 = vmatpush1.bf16.msra.mxu0 %v1163
    %1690 = vmatprep.subr.bf16.mxu0 %v1168
    %1691 = vmatpush1.bf16.msra.mxu0 %v1167
    %1692 = vmatprep.subr.bf16.mxu0 %v1172
    %1693 = vmatpush1.bf16.msra.mxu0 %v1171
    %1694 = vmatprep.subr.bf16.mxu0 %v1176
    %1695 = vmatpush1.bf16.msra.mxu0 %v1175
    %1696 = vmatprep.subr.bf16.mxu0 %v1180
    %1697 = vmatpush1.bf16.msra.mxu0 %v1179
    %1698 = vmatprep.subr.bf16.mxu0 %v1184
    %1699 = vmatpush1.bf16.msra.mxu0 %v1183
    %1700 = vmatprep.mubr.bf16.mxu0 %v247
    %1701 = vmatmul.mubr.bf16.gmra.mrb[0].mxu0 %v246
    %v1702 = vpop.f32.mrb[0].mxu0
    %v1703 = vadd.f32 %v1660, %v1702
    %v1704 = vpop.f32.mrb[0].mxu0
    %v1705 = vadd.f32 %v1662, %v1704
    %v1706 = vpop.f32.mrb[0].mxu0
    %v1707 = vadd.f32 %v1664, %v1706
    %v1708 = vpop.f32.mrb[0].mxu0
    %v1709 = vadd.f32 %v1666, %v1708
    %1710 = vdwg.mxu0
    %1711 = vmatprep.subr.bf16.mxu0 %v1188
    %1712 = vmatpush1.bf16.msra.mxu0 %v1187
    %1713 = vmatprep.subr.bf16.mxu0 %v1192
    %1714 = vmatpush1.bf16.msra.mxu0 %v1191
    %1715 = vmatprep.subr.bf16.mxu0 %v1196
    %1716 = vmatpush1.bf16.msra.mxu0 %v1195
    %1717 = vmatprep.subr.bf16.mxu0 %v1200
    %1718 = vmatpush1.bf16.msra.mxu0 %v1199
    %1719 = vmatprep.subr.bf16.mxu0 %v1204
    %1720 = vmatpush1.bf16.msra.mxu0 %v1203
    %1721 = vmatprep.subr.bf16.mxu0 %v1208
    %1722 = vmatpush1.bf16.msra.mxu0 %v1207
    %1723 = vmatprep.subr.bf16.mxu0 %v1212
    %1724 = vmatpush1.bf16.msra.mxu0 %v1211
    %1725 = vmatprep.subr.bf16.mxu0 %v1216
    %1726 = vmatpush1.bf16.msra.mxu0 %v1215
    %1727 = vmatprep.subr.bf16.mxu0 %v1220
    %1728 = vmatpush1.bf16.msra.mxu0 %v1219
    %1729 = vmatprep.subr.bf16.mxu0 %v1224
    %1730 = vmatpush1.bf16.msra.mxu0 %v1223
    %1731 = vmatprep.subr.bf16.mxu0 %v1228
    %1732 = vmatpush1.bf16.msra.mxu0 %v1227
    %1733 = vmatprep.subr.bf16.mxu0 %v1232
    %1734 = vmatpush1.bf16.msra.mxu0 %v1231
    %1735 = vmatprep.subr.bf16.mxu0 %v1236
    %1736 = vmatpush1.bf16.msra.mxu0 %v1235
    %1737 = vmatprep.subr.bf16.mxu0 %v1240
    %1738 = vmatpush1.bf16.msra.mxu0 %v1239
    %1739 = vmatprep.subr.bf16.mxu0 %v1244
    %1740 = vmatpush1.bf16.msra.mxu0 %v1243
    %1741 = vmatprep.subr.bf16.mxu0 %v1248
    %1742 = vmatpush1.bf16.msra.mxu0 %v1247
    %1743 = vmatprep.mubr.bf16.mxu0 %v249
    %1744 = vmatmul.mubr.bf16.gmra.mrb[0].mxu0 %v248
    %v1745 = vpop.f32.mrb[0].mxu0
    %v1746 = vadd.f32 %v1703, %v1745
    %v1747 = vpop.f32.mrb[0].mxu0
    %v1748 = vadd.f32 %v1705, %v1747
    %v1749 = vpop.f32.mrb[0].mxu0
    %v1750 = vadd.f32 %v1707, %v1749
    %v1751 = vpop.f32.mrb[0].mxu0
    %v1752 = vadd.f32 %v1709, %v1751
    %1753 = vdwg.mxu0
    %1754 = vmatprep.subr.bf16.mxu0 %v1252
    %1755 = vmatpush1.bf16.msra.mxu0 %v1251
    %1756 = vmatprep.subr.bf16.mxu0 0
    %1757 = vmatpush1.bf16.msra.mxu0 0
    %1758 = vmatprep.subr.bf16.mxu0 0
    %1759 = vmatpush1.bf16.msra.mxu0 0
    %1760 = vmatprep.subr.bf16.mxu0 0
    %1761 = vmatpush1.bf16.msra.mxu0 0
    %1762 = vmatprep.subr.bf16.mxu0 0
    %1763 = vmatpush1.bf16.msra.mxu0 0
    %1764 = vmatprep.subr.bf16.mxu0 0
    %1765 = vmatpush1.bf16.msra.mxu0 0
    %1766 = vmatprep.subr.bf16.mxu0 0
    %1767 = vmatpush1.bf16.msra.mxu0 0
    %1768 = vmatprep.subr.bf16.mxu0 0
    %1769 = vmatpush1.bf16.msra.mxu0 0
    %1770 = vmatprep.subr.bf16.mxu0 0
    %1771 = vmatpush1.bf16.msra.mxu0 0
    %1772 = vmatprep.subr.bf16.mxu0 0
    %1773 = vmatpush1.bf16.msra.mxu0 0
    %1774 = vmatprep.subr.bf16.mxu0 0
    %1775 = vmatpush1.bf16.msra.mxu0 0
    %1776 = vmatprep.subr.bf16.mxu0 0
    %1777 = vmatpush1.bf16.msra.mxu0 0
    %1778 = vmatprep.subr.bf16.mxu0 0
    %1779 = vmatpush1.bf16.msra.mxu0 0
    %1780 = vmatprep.subr.bf16.mxu0 0
    %1781 = vmatpush1.bf16.msra.mxu0 0
    %1782 = vmatprep.subr.bf16.mxu0 0
    %1783 = vmatpush1.bf16.msra.mxu0 0
    %1784 = vmatprep.subr.bf16.mxu0 0
    %1785 = vmatpush1.bf16.msra.mxu0 0
    %1786 = vmatprep.mubr.bf16.mxu0 0
    %1787 = vmatmul.mubr.bf16.gmra.mrb[0].mxu0 %v1451
    %v1788 = vpop.f32.mrb[0].mxu0
    %v1789 = vadd.f32 %v1746, %v1788
    %v1790 = vpop.f32.mrb[0].mxu0
    %v1791 = vadd.f32 %v1748, %v1790
    %v1792 = vpop.f32.mrb[0].mxu0
    %v1793 = vadd.f32 %v1750, %v1792
    %v1794 = vpop.f32.mrb[0].mxu0
    %v1795 = vadd.f32 %v1752, %v1794
    %1796 = vdwg.mxu0
    %v1797 = vmax.f32 %v1617, 0.0
    %v1798 = vmax.f32 %v1619, 0.0
    %v1799 = vmax.f32 %v1789, 0.0
    %v1800 = vmax.f32 %v1791, 0.0
    %v1801 = vmax.f32 %v1621, 0.0
    %v1802 = vmax.f32 %v1623, 0.0
    %v1803 = vmax.f32 %v1793, 0.0
    %v1804 = vmax.f32 %v1795, 0.0
    %v1805 = vpack.c.bf16 %v1801, %v1797
    %v1806 = vpack.c.bf16 %v1802, %v1798
    %v1807 = vpack.c.bf16 %v1803, %v1799
    %v1808 = vpack.c.bf16 %v1804, %v1800
    %v1809 = vld [vmem:[#allocation5] sm:$0xf]
    %v1810 = vld [vmem:[#allocation5 + $0x4] sm:$0xf]
    %v1811 = vld [vmem:[#allocation5 + $0x8] sm:$0xf]
    %v1812 = vld [vmem:[#allocation5 + $0xc] sm:$0xf]
    %v1813 = vld [vmem:[#allocation5 + $0x10] sm:$0xf]
    %v1814 = vld [vmem:[#allocation5 + $0x14] sm:$0xf]
    %v1815 = vld [vmem:[#allocation5 + $0x18] sm:$0xf]
    %v1816 = vld [vmem:[#allocation5 + $0x1c] sm:$0xf]
    %v1817 = vld [vmem:[#allocation5 + $0x20] sm:$0xf]
    %v1818 = vld [vmem:[#allocation5 + $0x24] sm:$0xf]
    %v1819 = vld [vmem:[#allocation5 + $0x28] sm:$0xf]
    %v1820 = vld [vmem:[#allocation5 + $0x2c] sm:$0xf]
    %v1821 = vld [vmem:[#allocation5 + $0x30] sm:$0xf]
    %v1822 = vld [vmem:[#allocation5 + $0x34] sm:$0xf]
    %v1823 = vld [vmem:[#allocation5 + $0x38] sm:$0xf]
    %v1824 = vld [vmem:[#allocation5 + $0x3c] sm:$0xf]
    %v1825 = vld [vmem:[#allocation5 + $0x40] sm:$0xf]
    %v1826 = vld [vmem:[#allocation5 + $0x44] sm:$0xf]
    %v1827 = vld [vmem:[#allocation5 + $0x48] sm:$0xf]
    %v1828 = vld [vmem:[#allocation5 + $0x4c] sm:$0xf]
    %v1829 = vld [vmem:[#allocation5 + $0x50] sm:$0xf]
    %v1830 = vld [vmem:[#allocation5 + $0x54] sm:$0xf]
    %v1831 = vld [vmem:[#allocation5 + $0x58] sm:$0xf]
    %v1832 = vld [vmem:[#allocation5 + $0x5c] sm:$0xf]
    %v1833 = vld [vmem:[#allocation5 + $0x60] sm:$0xf]
    %v1834 = vld [vmem:[#allocation5 + $0x64] sm:$0xf]
    %v1835 = vld [vmem:[#allocation5 + $0x68] sm:$0xf]
    %v1836 = vld [vmem:[#allocation5 + $0x6c] sm:$0xf]
    %v1837 = vld [vmem:[#allocation5 + $0x70] sm:$0xf]
    %v1838 = vld [vmem:[#allocation5 + $0x74] sm:$0xf]
    %v1839 = vld [vmem:[#allocation5 + $0x78] sm:$0xf]
    %v1840 = vld [vmem:[#allocation5 + $0x7c] sm:$0xf]
    %v1841 = vld [vmem:[#allocation5 + $0x80] sm:$0xf]
    %v1842 = vld [vmem:[#allocation5 + $0x84] sm:$0xf]
    %v1843 = vld [vmem:[#allocation5 + $0x88] sm:$0xf]
    %v1844 = vld [vmem:[#allocation5 + $0x8c] sm:$0xf]
    %v1845 = vld [vmem:[#allocation5 + $0x90] sm:$0xf]
    %v1846 = vld [vmem:[#allocation5 + $0x94] sm:$0xf]
    %v1847 = vld [vmem:[#allocation5 + $0x98] sm:$0xf]
    %v1848 = vld [vmem:[#allocation5 + $0x9c] sm:$0xf]
    %v1849 = vld [vmem:[#allocation5 + $0xa0] sm:$0xf]
    %v1850 = vld [vmem:[#allocation5 + $0xa4] sm:$0xf]
    %v1851 = vld [vmem:[#allocation5 + $0xa8] sm:$0xf]
    %v1852 = vld [vmem:[#allocation5 + $0xac] sm:$0xf]
    %v1853 = vld [vmem:[#allocation5 + $0xb0] sm:$0xf]
    %v1854 = vld [vmem:[#allocation5 + $0xb4] sm:$0xf]
    %v1855 = vld [vmem:[#allocation5 + $0xb8] sm:$0xf]
    %v1856 = vld [vmem:[#allocation5 + $0xbc] sm:$0xf]
    %v1857 = vld [vmem:[#allocation5 + $0xc0] sm:$0xf]
    %v1858 = vld [vmem:[#allocation5 + $0xc4] sm:$0xf]
    %v1859 = vld [vmem:[#allocation5 + $0xc8] sm:$0xf]
    %v1860 = vld [vmem:[#allocation5 + $0xcc] sm:$0xf]
    %v1861 = vld [vmem:[#allocation5 + $0xd0] sm:$0xf]
    %v1862 = vld [vmem:[#allocation5 + $0xd4] sm:$0xf]
    %v1863 = vld [vmem:[#allocation5 + $0xd8] sm:$0xf]
    %v1864 = vld [vmem:[#allocation5 + $0xdc] sm:$0xf]
    %v1865 = vld [vmem:[#allocation5 + $0xe0] sm:$0xf]
    %v1866 = vld [vmem:[#allocation5 + $0xe4] sm:$0xf]
    %v1867 = vld [vmem:[#allocation5 + $0xe8] sm:$0xf]
    %v1868 = vld [vmem:[#allocation5 + $0xec] sm:$0xf]
    %v1869 = vld [vmem:[#allocation5 + $0xf0] sm:$0xf]
    %v1870 = vld [vmem:[#allocation5 + $0xf4] sm:$0xf]
    %v1871 = vld [vmem:[#allocation5 + $0xf8] sm:$0xf]
    %v1872 = vld [vmem:[#allocation5 + $0xfc] sm:$0xf]
    %v1873 = vld [vmem:[%s4] sm:$0x1]
    %v1875 = vlaneseq
    %v1876 = vshrl.u32 %v1875, 7
    %v1877 = vsub.s32 0, %v1876
    %v1878 = vrot.slane %v1873, %v1877
    %v1944 = vunpack.c.l.b16 %v1809
    %v1945 = vunpack.c.l.b16 %v1810
    %v1946 = vunpack.c.l.b16 %v1811
    %v1947 = vunpack.c.l.b16 %v1812
    %v1948 = vunpack.c.l.b16 %v1813
    %v1949 = vunpack.c.l.b16 %v1814
    %v1950 = vunpack.c.l.b16 %v1815
    %v1951 = vunpack.c.l.b16 %v1816
    %v1952 = vunpack.c.l.b16 %v1817
    %v1953 = vunpack.c.l.b16 %v1818
    %v1954 = vunpack.c.l.b16 %v1819
    %v1955 = vunpack.c.l.b16 %v1820
    %v1956 = vunpack.c.l.b16 %v1821
    %v1957 = vunpack.c.l.b16 %v1822
    %v1958 = vunpack.c.l.b16 %v1823
    %v1959 = vunpack.c.l.b16 %v1824
    %v1960 = vunpack.c.l.b16 %v1825
    %v1961 = vunpack.c.l.b16 %v1826
    %v1962 = vunpack.c.l.b16 %v1827
    %v1963 = vunpack.c.l.b16 %v1828
    %v1964 = vunpack.c.l.b16 %v1829
    %v1965 = vunpack.c.l.b16 %v1830
    %v1966 = vunpack.c.l.b16 %v1831
    %v1967 = vunpack.c.l.b16 %v1832
    %v1968 = vunpack.c.l.b16 %v1833
    %v1969 = vunpack.c.l.b16 %v1834
    %v1970 = vunpack.c.l.b16 %v1835
    %v1971 = vunpack.c.l.b16 %v1836
    %v1972 = vunpack.c.l.b16 %v1837
    %v1973 = vunpack.c.l.b16 %v1838
    %v1974 = vunpack.c.l.b16 %v1839
    %v1975 = vunpack.c.l.b16 %v1840
    %v1976 = vunpack.c.l.b16 %v1841
    %v1977 = vunpack.c.l.b16 %v1842
    %v1978 = vunpack.c.l.b16 %v1843
    %v1979 = vunpack.c.l.b16 %v1844
    %v1980 = vunpack.c.l.b16 %v1845
    %v1981 = vunpack.c.l.b16 %v1846
    %v1982 = vunpack.c.l.b16 %v1847
    %v1983 = vunpack.c.l.b16 %v1848
    %v1984 = vunpack.c.l.b16 %v1849
    %v1985 = vunpack.c.l.b16 %v1850
    %v1986 = vunpack.c.l.b16 %v1851
    %v1987 = vunpack.c.l.b16 %v1852
    %v1988 = vunpack.c.l.b16 %v1853
    %v1989 = vunpack.c.l.b16 %v1854
    %v1990 = vunpack.c.l.b16 %v1855
    %v1991 = vunpack.c.l.b16 %v1856
    %v1992 = vunpack.c.l.b16 %v1857
    %v1993 = vunpack.c.l.b16 %v1858
    %v1994 = vunpack.c.l.b16 %v1859
    %v1995 = vunpack.c.l.b16 %v1860
    %v1996 = vunpack.c.l.b16 %v1861
    %v1997 = vunpack.c.l.b16 %v1862
    %v1998 = vunpack.c.l.b16 %v1863
    %v1999 = vunpack.c.l.b16 %v1864
    %v2000 = vunpack.c.l.b16 %v1865
    %v2001 = vunpack.c.l.b16 %v1866
    %v2002 = vunpack.c.l.b16 %v1867
    %v2003 = vunpack.c.l.b16 %v1868
    %v2004 = vunpack.c.l.b16 %v1869
    %v2005 = vunpack.c.l.b16 %v1870
    %v2006 = vunpack.c.l.b16 %v1871
    %v2007 = vunpack.c.l.b16 %v1872
    %v2008 = vpack.c.b16 %v1945, %v1944
    %v2009 = vpack.c.b16 %v1947, %v1946
    %v2010 = vpack.c.b16 %v1949, %v1948
    %v2011 = vpack.c.b16 %v1951, %v1950
    %v2012 = vpack.c.b16 %v1953, %v1952
    %v2013 = vpack.c.b16 %v1955, %v1954
    %v2014 = vpack.c.b16 %v1957, %v1956
    %v2015 = vpack.c.b16 %v1959, %v1958
    %v2016 = vpack.c.b16 %v1961, %v1960
    %v2017 = vpack.c.b16 %v1963, %v1962
    %v2018 = vpack.c.b16 %v1965, %v1964
    %v2019 = vpack.c.b16 %v1967, %v1966
    %v2020 = vpack.c.b16 %v1969, %v1968
    %v2021 = vpack.c.b16 %v1971, %v1970
    %v2022 = vpack.c.b16 %v1973, %v1972
    %v2023 = vpack.c.b16 %v1975, %v1974
    %v2024 = vpack.c.b16 %v1977, %v1976
    %v2025 = vpack.c.b16 %v1979, %v1978
    %v2026 = vpack.c.b16 %v1981, %v1980
    %v2027 = vpack.c.b16 %v1983, %v1982
    %v2028 = vpack.c.b16 %v1985, %v1984
    %v2029 = vpack.c.b16 %v1987, %v1986
    %v2030 = vpack.c.b16 %v1989, %v1988
    %v2031 = vpack.c.b16 %v1991, %v1990
    %v2032 = vpack.c.b16 %v1993, %v1992
    %v2033 = vpack.c.b16 %v1995, %v1994
    %v2034 = vpack.c.b16 %v1997, %v1996
    %v2035 = vpack.c.b16 %v1999, %v1998
    %v2036 = vpack.c.b16 %v2001, %v2000
    %v2037 = vpack.c.b16 %v2003, %v2002
    %v2038 = vpack.c.b16 %v2005, %v2004
    %v2039 = vpack.c.b16 %v2007, %v2006
    %2072 = vmatprep.subr.bf16.mxu0 0
    %2073 = vmatpush1.bf16.msra.mxu0 %v2008
    %2074 = vmatprep.subr.bf16.mxu0 0
    %2075 = vmatpush1.bf16.msra.mxu0 %v2009
    %2076 = vmatprep.subr.bf16.mxu0 0
    %2077 = vmatpush1.bf16.msra.mxu0 %v2010
    %2078 = vmatprep.subr.bf16.mxu0 0
    %2079 = vmatpush1.bf16.msra.mxu0 %v2011
    %2080 = vmatprep.subr.bf16.mxu0 0
    %2081 = vmatpush1.bf16.msra.mxu0 %v2012
    %2082 = vmatprep.subr.bf16.mxu0 0
    %2083 = vmatpush1.bf16.msra.mxu0 %v2013
    %2084 = vmatprep.subr.bf16.mxu0 0
    %2085 = vmatpush1.bf16.msra.mxu0 %v2014
    %2086 = vmatprep.subr.bf16.mxu0 0
    %2087 = vmatpush1.bf16.msra.mxu0 %v2015
    %2088 = vmatprep.subr.bf16.mxu0 0
    %2089 = vmatpush1.bf16.msra.mxu0 %v2016
    %2090 = vmatprep.subr.bf16.mxu0 0
    %2091 = vmatpush1.bf16.msra.mxu0 %v2017
    %2092 = vmatprep.subr.bf16.mxu0 0
    %2093 = vmatpush1.bf16.msra.mxu0 %v2018
    %2094 = vmatprep.subr.bf16.mxu0 0
    %2095 = vmatpush1.bf16.msra.mxu0 %v2019
    %2096 = vmatprep.subr.bf16.mxu0 0
    %2097 = vmatpush1.bf16.msra.mxu0 %v2020
    %2098 = vmatprep.subr.bf16.mxu0 0
    %2099 = vmatpush1.bf16.msra.mxu0 %v2021
    %2100 = vmatprep.subr.bf16.mxu0 0
    %2101 = vmatpush1.bf16.msra.mxu0 %v2022
    %2102 = vmatprep.subr.bf16.mxu0 0
    %2103 = vmatpush1.bf16.msra.mxu0 %v2023
    %2104 = vmatprep.mubr.bf16.mxu0 %v1806
    %2105 = vmatmul.mubr.bf16.gmra.mrb[0].mxu0 %v1805
    %v2106 = vpop.f32.mrb[0].mxu0
    %v2107 = vadd.f32 %v1878, %v2106
    %v2108 = vpop.f32.mrb[0].mxu0
    %v2109 = vpop.f32.mrb[0].mxu0
    %v2110 = vadd.f32 %v1878, %v2109
    %v2111 = vpop.f32.mrb[0].mxu0
    %2112 = vdwg.mxu0
    %2113 = vmatprep.subr.bf16.mxu0 0
    %2114 = vmatpush1.bf16.msra.mxu0 %v2024
    %2115 = vmatprep.subr.bf16.mxu0 0
    %2116 = vmatpush1.bf16.msra.mxu0 %v2025
    %2117 = vmatprep.subr.bf16.mxu0 0
    %2118 = vmatpush1.bf16.msra.mxu0 %v2026
    %2119 = vmatprep.subr.bf16.mxu0 0
    %2120 = vmatpush1.bf16.msra.mxu0 %v2027
    %2121 = vmatprep.subr.bf16.mxu0 0
    %2122 = vmatpush1.bf16.msra.mxu0 %v2028
    %2123 = vmatprep.subr.bf16.mxu0 0
    %2124 = vmatpush1.bf16.msra.mxu0 %v2029
    %2125 = vmatprep.subr.bf16.mxu0 0
    %2126 = vmatpush1.bf16.msra.mxu0 %v2030
    %2127 = vmatprep.subr.bf16.mxu0 0
    %2128 = vmatpush1.bf16.msra.mxu0 %v2031
    %2129 = vmatprep.subr.bf16.mxu0 0
    %2130 = vmatpush1.bf16.msra.mxu0 %v2032
    %2131 = vmatprep.subr.bf16.mxu0 0
    %2132 = vmatpush1.bf16.msra.mxu0 %v2033
    %2133 = vmatprep.subr.bf16.mxu0 0
    %2134 = vmatpush1.bf16.msra.mxu0 %v2034
    %2135 = vmatprep.subr.bf16.mxu0 0
    %2136 = vmatpush1.bf16.msra.mxu0 %v2035
    %2137 = vmatprep.subr.bf16.mxu0 0
    %2138 = vmatpush1.bf16.msra.mxu0 %v2036
    %2139 = vmatprep.subr.bf16.mxu0 0
    %2140 = vmatpush1.bf16.msra.mxu0 %v2037
    %2141 = vmatprep.subr.bf16.mxu0 0
    %2142 = vmatpush1.bf16.msra.mxu0 %v2038
    %2143 = vmatprep.subr.bf16.mxu0 0
    %2144 = vmatpush1.bf16.msra.mxu0 %v2039
    %2145 = vmatprep.mubr.bf16.mxu0 %v1808
    %2146 = vmatmul.mubr.bf16.gmra.mrb[0].mxu0 %v1807
    %v2147 = vpop.f32.mrb[0].mxu0
    %v2148 = vadd.f32 %v2107, %v2147
    %v2149 = vpop.f32.mrb[0].mxu0
    %v2150 = vpop.f32.mrb[0].mxu0
    %v2151 = vadd.f32 %v2110, %v2150
    %v2152 = vpop.f32.mrb[0].mxu0
    %2153 = vdwg.mxu0
    %v2154 = vmax.f32 %v2148, 0.0
    %v2155 = vmax.f32 %v2151, 0.0
    %v2156 = vpack.c.bf16 %v2155, %v2154
    %v2157 = vld [vmem:[%s5] sm:$0xf]
    %v2158 = vld [vmem:[%s5 + $0x4] sm:$0xf]
    %v2159 = vld [vmem:[%s5 + $0x8] sm:$0xf]
    %v2160 = vld [vmem:[%s5 + $0xc] sm:$0xf]
    %v2161 = vld [vmem:[%s5 + $0x10] sm:$0xf]
    %v2162 = vld [vmem:[%s5 + $0x14] sm:$0xf]
    %v2163 = vld [vmem:[%s5 + $0x18] sm:$0xf]
    %v2164 = vld [vmem:[%s5 + $0x1c] sm:$0xf]
    %v2165 = vld [vmem:[%s5 + $0x20] sm:$0xf]
    %v2166 = vld [vmem:[%s5 + $0x24] sm:$0xf]
    %v2167 = vld [vmem:[%s5 + $0x28] sm:$0xf]
    %v2168 = vld [vmem:[%s5 + $0x2c] sm:$0xf]
    %v2169 = vld [vmem:[%s5 + $0x30] sm:$0xf]
    %v2170 = vld [vmem:[%s5 + $0x34] sm:$0xf]
    %v2171 = vld [vmem:[%s5 + $0x38] sm:$0xf]
    %v2172 = vld [vmem:[%s5 + $0x3c] sm:$0xf]
    %v2173 = vld [vmem:[%s6] sm:$0x1]
    %v2175 = vlaneseq
    %v2176 = vshrl.u32 %v2175, 7
    %v2177 = vsub.s32 0, %v2176
    %v2178 = vrot.slane %v2173, %v2177
    %v2196 = vunpack.c.l.b16 %v2157
    %v2197 = vunpack.c.l.b16 %v2158
    %v2198 = vunpack.c.l.b16 %v2159
    %v2199 = vunpack.c.l.b16 %v2160
    %v2200 = vunpack.c.l.b16 %v2161
    %v2201 = vunpack.c.l.b16 %v2162
    %v2202 = vunpack.c.l.b16 %v2163
    %v2203 = vunpack.c.l.b16 %v2164
    %v2204 = vunpack.c.l.b16 %v2165
    %v2205 = vunpack.c.l.b16 %v2166
    %v2206 = vunpack.c.l.b16 %v2167
    %v2207 = vunpack.c.l.b16 %v2168
    %v2208 = vunpack.c.l.b16 %v2169
    %v2209 = vunpack.c.l.b16 %v2170
    %v2210 = vunpack.c.l.b16 %v2171
    %v2211 = vunpack.c.l.b16 %v2172
    %v2212 = vpack.c.b16 %v2197, %v2196
    %v2213 = vpack.c.b16 %v2199, %v2198
    %v2214 = vpack.c.b16 %v2201, %v2200
    %v2215 = vpack.c.b16 %v2203, %v2202
    %v2216 = vpack.c.b16 %v2205, %v2204
    %v2217 = vpack.c.b16 %v2207, %v2206
    %v2218 = vpack.c.b16 %v2209, %v2208
    %v2219 = vpack.c.b16 %v2211, %v2210
    %2228 = vmatprep.subr.bf16.mxu0 0
    %2229 = vmatpush1.bf16.msra.mxu0 %v2212
    %2230 = vmatprep.subr.bf16.mxu0 0
    %2231 = vmatpush1.bf16.msra.mxu0 %v2213
    %2232 = vmatprep.subr.bf16.mxu0 0
    %2233 = vmatpush1.bf16.msra.mxu0 %v2214
    %2234 = vmatprep.subr.bf16.mxu0 0
    %2235 = vmatpush1.bf16.msra.mxu0 %v2215
    %2236 = vmatprep.subr.bf16.mxu0 0
    %2237 = vmatpush1.bf16.msra.mxu0 %v2216
    %2238 = vmatprep.subr.bf16.mxu0 0
    %2239 = vmatpush1.bf16.msra.mxu0 %v2217
    %2240 = vmatprep.subr.bf16.mxu0 0
    %2241 = vmatpush1.bf16.msra.mxu0 %v2218
    %2242 = vmatprep.subr.bf16.mxu0 0
    %2243 = vmatpush1.bf16.msra.mxu0 %v2219
    %2244 = vmatprep.subr.bf16.mxu0 0
    %2245 = vmatpush1.bf16.msra.mxu0 0
    %2246 = vmatprep.subr.bf16.mxu0 0
    %2247 = vmatpush1.bf16.msra.mxu0 0
    %2248 = vmatprep.subr.bf16.mxu0 0
    %2249 = vmatpush1.bf16.msra.mxu0 0
    %2250 = vmatprep.subr.bf16.mxu0 0
    %2251 = vmatpush1.bf16.msra.mxu0 0
    %2252 = vmatprep.subr.bf16.mxu0 0
    %2253 = vmatpush1.bf16.msra.mxu0 0
    %2254 = vmatprep.subr.bf16.mxu0 0
    %2255 = vmatpush1.bf16.msra.mxu0 0
    %2256 = vmatprep.subr.bf16.mxu0 0
    %2257 = vmatpush1.bf16.msra.mxu0 0
    %2258 = vmatprep.subr.bf16.mxu0 0
    %2259 = vmatpush1.bf16.msra.mxu0 0
    %2260 = vmatprep.mubr.bf16.mxu0 0
    %2261 = vmatmul.mubr.bf16.gmra.mrb[0].mxu0 %v2156
    %v2262 = vpop.f32.mrb[0].mxu0
    %v2263 = vadd.f32 %v2178, %v2262
    %v2264 = vpop.f32.mrb[0].mxu0
    %v2265 = vpop.f32.mrb[0].mxu0
    %v2266 = vadd.f32 %v2178, %v2265
    %v2267 = vpop.f32.mrb[0].mxu0
    %2268 = vdwg.mxu0
    %2269 = vst [vmem:[#allocation7] sm:$0xff] %v2263
    %2270 = vst [vmem:[#allocation7 + $0x8] sm:$0xff] %v2266
    // Predicated region
    $region38: #{mlp_classifier_e.1} parent=1 // pred_check
      _
    $region39: #{mlp_classifier_e.1} parent=1 // pred_check_branch
      %2272 = sbr.rel (0) target = $region41
    $region40: #{mlp_classifier_e.1} parent=1 // pred_region
      %s2274 = ssub.s32 256, 32
      %2275 = vsyncadd [#allocation4], %s2274
      %s2276 = sshll.u32 [#allocation7], 4
      %s2277 = int_to_ptr.vmem [resolvable:$true] %s2276
      %2282 = dma.vmem_to_hbm [thread:$0]  %s2277, 32, %s7, [#allocation4], 32, 32, 2
    $region41: #{mlp_classifier_e.1} parent=1 // pred_fallthru
      _
    // Predicated region
    $region42: #{mlp_classifier_e.1} parent=1 // pred_check
      _
    $region43: #{mlp_classifier_e.1} parent=1 // pred_check_branch
      %2284 = sbr.rel (0) target = $region45
    $region44: #{mlp_classifier_e.1} parent=1 // pred_region
      %2285 = dma.done [#allocation4], 256
    $region45: #{mlp_classifier_e.1} parent=1 // pred_fallthru
      _
    %2286 = vsyncpa [#allocation3], 1
    %2287 = vsyncpa [#allocation6], 1
    %2288 = vsyncpa [#allocation4], 1

</llo_original>
